<compile_context>
chip_gen: v7x
topology: tpu7x:2x2x1
jax: 0.10.0
libtpu: 0.0.40
codegen_flags: <defaults>
</compile_context>

<pallas_src>
import jax
import jax.numpy as jnp
from jax.experimental import pallas as pl
from jax.experimental.pallas import tpu as pltpu


def _encoder_lstm_kernel(x_ref, wih_ref, whh_ref, b_ref,
                         h_out_ref, c_out_ref, pg_ref):
    """x_ref: (T*B_pad, E) bf16 time-major; wih_ref: (E, 4*H_pad) bf16;
    whh_ref: (H_pad, 4*H_pad) bf16; b_ref: (1, 4*H_pad) f32;
    outputs: (B_pad, H_pad) f32; pg_ref: (T*B_pad, 4*H_pad) f32 VMEM scratch."""
    B, H = h_out_ref.shape                      # padded: (8k, 128m)
    T = x_ref.shape[0] // B

    # Hoisted input projection: one batched MXU matmul (M = T*B_pad) + bias,
    # written to VMEM scratch so only one slab is live per recurrence step.
    pg_ref[...] = (jnp.dot(x_ref[...], wih_ref[...],
                           preferred_element_type=jnp.float32)
                   + b_ref[...])

    whh = whh_ref[...]                          # (H_pad, 4*H_pad) bf16, resident

    def step(t, carry):
        h, c = carry
        row = pl.multiple_of(t * B, B)          # sublane-aligned slab start
        gates = (jnp.dot(h.astype(whh.dtype), whh,
                         preferred_element_type=jnp.float32)
                 + pg_ref[pl.ds(row, B), :])    # (B_pad, 4*H_pad) f32

        # Lane-aligned gate bands (H_pad is a multiple of 128).
        i_g = jax.nn.sigmoid(gates[:, 0 * H:1 * H])
        f_g = jax.nn.sigmoid(gates[:, 1 * H:2 * H])
        g_g = jnp.tanh(gates[:, 2 * H:3 * H])
        o_g = jax.nn.sigmoid(gates[:, 3 * H:4 * H])

        c_new = f_g * c + i_g * g_g
        h_new = o_g * jnp.tanh(c_new)
        return (h_new, c_new)

    h0 = jnp.zeros((B, H), jnp.float32)
    c0 = jnp.zeros((B, H), jnp.float32)
    h, c = jax.lax.fori_loop(0, T, step, (h0, c0), unroll=True)

    h_out_ref[...] = h
    c_out_ref[...] = c


def lstm_final_state(x_time_major, w_ih_t, w_hh_t, bias, b_pad, h_pad, seq_len):
    """x_time_major: (T*B_pad, E) bf16; returns (h, c), each (B_pad, H_pad) f32."""
    vmem = pl.BlockSpec(memory_space=pltpu.MemorySpace.VMEM)
    return pl.pallas_call(
        _encoder_lstm_kernel,
        out_shape=(jax.ShapeDtypeStruct((b_pad, h_pad), jnp.float32),
                   jax.ShapeDtypeStruct((b_pad, h_pad), jnp.float32)),
        in_specs=[vmem, vmem, vmem, vmem],
        out_specs=(vmem, vmem),
        scratch_shapes=[pltpu.VMEM((seq_len * b_pad, 4 * h_pad), jnp.float32)],
        compiler_params=pltpu.CompilerParams(
            vmem_limit_bytes=64 * 1024 * 1024),
    )(x_time_major, w_ih_t, w_hh_t, bias)


def _round_up(x, m):
    return (x + m - 1) // m * m


def _pad_gate_bands(w, h, h_pad):
    """(rows, 4H) -> (rows, 4*H_pad): gate block g placed at [g*H_pad : g*H_pad+H]."""
    if h_pad == h:
        return w
    blocks = [jnp.pad(w[:, g * h:(g + 1) * h], ((0, 0), (0, h_pad - h)))
              for g in range(4)]
    return jnp.concatenate(blocks, axis=1)


def encoder_forward(sequence, params, padding_idx=0):
    """sequence: (B, T) int32 token ids. Returns (h_n, c_n), each (1, B, H),
    matching PyTorch nn.LSTM(batch_first=True) final state."""
    B, T = sequence.shape
    H = params["w_hh_t"].shape[0]
    B_pad = _round_up(max(B, 8), 8)
    H_pad = _round_up(H, 128)

    # Pad batch rows (with the padding token; those rows are sliced off) and
    # gather the embedding directly in time-major order — the transpose is
    # fused into the tiny integer index array, never the activations.
    if B_pad > B:
        pad = jnp.full((B_pad - B, T), padding_idx, sequence.dtype)
        seq_p = jnp.concatenate([sequence, pad], axis=0)
    else:
        seq_p = sequence
    idx_tm = jnp.transpose(seq_p, (1, 0)).reshape(-1)              # (T*B_pad,)
    x = jnp.take(params["embedding"], idx_tm, axis=0)              # (T*B_pad, E)
    x = x.astype(jnp.bfloat16)

    # Scatter real gate blocks into lane-aligned (128-wide) gate bands; padded
    # lanes/rows carry zero weights so they stay exactly 0 in the recurrence.
    wih_p = _pad_gate_bands(params["w_ih_t"], H, H_pad).astype(jnp.bfloat16)
    whh_p = _pad_gate_bands(params["w_hh_t"], H, H_pad)            # (H, 4*H_pad)
    whh_p = jnp.pad(whh_p, ((0, H_pad - H), (0, 0))).astype(jnp.bfloat16)
    bias_p = _pad_gate_bands(params["bias"], H, H_pad)             # (1, 4*H_pad) f32

    h_p, c_p = lstm_final_state(x, wih_p, whh_p, bias_p, B_pad, H_pad, T)
    h_n = h_p[:B, :H]
    c_n = c_p[:B, :H]
    return h_n[None, :, :], c_n[None, :, :]


def _reference_forward(sequence, params):
    """Pure-JAX reference (lax.scan) with identical bf16-input / f32-acc math.
    Note: bf16 matmul inputs deviate slightly from PyTorch's f32 nn.LSTM; at
    these sequence lengths the error stays well within 2e-3."""
    emb = jnp.take(params["embedding"], sequence, axis=0)          # (B, T, E)
    x_tbe = jnp.transpose(emb, (1, 0, 2)).astype(jnp.bfloat16)     # (T, B, E)
    wih = params["w_ih_t"].astype(jnp.bfloat16)
    whh = params["w_hh_t"].astype(jnp.bfloat16)
    bias = params["bias"]
    B = sequence.shape[0]
    H = whh.shape[0]

    def step(carry, x_t):
        h, c = carry
        gates = (jnp.dot(x_t, wih, preferred_element_type=jnp.float32)
                 + jnp.dot(h.astype(jnp.bfloat16), whh,
                           preferred_element_type=jnp.float32)
                 + bias)
        i_g = jax.nn.sigmoid(gates[:, 0 * H:1 * H])
        f_g = jax.nn.sigmoid(gates[:, 1 * H:2 * H])
        g_g = jnp.tanh(gates[:, 2 * H:3 * H])
        o_g = jax.nn.sigmoid(gates[:, 3 * H:4 * H])
        c = f_g * c + i_g * g_g
        h = o_g * jnp.tanh(c)
        return (h, c), None

    init = (jnp.zeros((B, H), jnp.float32), jnp.zeros((B, H), jnp.float32))
    (h, c), _ = jax.lax.scan(step, init, x_tbe)
    return h[None], c[None]


def make_params(key, vocab_size, embedding_dim, hidden_dim, padding_idx):
    k_emb, k_wih, k_whh, k_bih, k_bhh = jax.random.split(key, 5)
    scale = 1.0 / jnp.sqrt(hidden_dim)
    embedding = jax.random.normal(k_emb, (vocab_size, embedding_dim), jnp.float32)
    embedding = embedding.at[padding_idx].set(0.0)       # nn.Embedding padding_idx
    # PyTorch LSTM weights: W_ih (4H, E), W_hh (4H, H); store transposed for x @ W^T.
    w_ih = jax.random.uniform(k_wih, (4 * hidden_dim, embedding_dim),
                              jnp.float32, -scale, scale)
    w_hh = jax.random.uniform(k_whh, (4 * hidden_dim, hidden_dim),
                              jnp.float32, -scale, scale)
    b_ih = jax.random.uniform(k_bih, (4 * hidden_dim,), jnp.float32, -scale, scale)
    b_hh = jax.random.uniform(k_bhh, (4 * hidden_dim,), jnp.float32, -scale, scale)
    return {
        "embedding": embedding,
        "w_ih_t": w_ih.T,                                # (E, 4H)
        "w_hh_t": w_hh.T,                                # (H, 4H)
        "bias": (b_ih + b_hh)[None, :],                  # (1, 4H)
    }


if __name__ == "__main__":
    VOCAB, EMB, HID = 50, 16, 32
    B, T = 2, 8
    PADDING_IDX = 0  # stand-in for char2id[' '] (util not available in-script)

    key = jax.random.PRNGKey(0)
    k_params, k_seq = jax.random.split(key)
    params = make_params(k_params, VOCAB, EMB, HID, PADDING_IDX)
    sequence = jax.random.randint(k_seq, (B, T), 0, VOCAB, dtype=jnp.int32)

    h_n, c_n = jax.block_until_ready(
        encoder_forward(sequence, params, padding_idx=PADDING_IDX))

    h_ref, c_ref = _reference_forward(sequence, params)
    assert h_n.shape == (1, B, HID) and c_n.shape == (1, B, HID)
    assert jnp.allclose(h_n, h_ref, atol=2e-3, rtol=2e-3)
    assert jnp.allclose(c_n, c_ref, atol=2e-3, rtol=2e-3)

    print("KERNEL_OK")
</pallas_src>

<mosaic_0001>
module attributes {stable_mosaic.version = 11 : i64} {
  func.func @_encoder_lstm_kernel(%arg0: memref<64x16xbf16, #tpu.memory_space<vmem>>, %arg1: memref<16x512xbf16, #tpu.memory_space<vmem>>, %arg2: memref<128x512xbf16, #tpu.memory_space<vmem>>, %arg3: memref<1x512xf32, #tpu.memory_space<vmem>>, %arg4: memref<8x128xf32, #tpu.memory_space<vmem>>, %arg5: memref<8x128xf32, #tpu.memory_space<vmem>>, %arg6: memref<64x512xf32, #tpu.memory_space<vmem>>) attributes {dimension_semantics = [], scalar_prefetch = 0 : i64, scratch_operands = 1 : i64, tpu.core_type = #tpu.core_type<tc>} {
    %c0 = arith.constant 0 : index
    %c0_0 = arith.constant 0 : index
    %0 = vector.load %arg0[%c0, %c0_0] : memref<64x16xbf16, #tpu.memory_space<vmem>>, vector<64x16xbf16>
    %c0_1 = arith.constant 0 : index
    %c0_2 = arith.constant 0 : index
    %1 = vector.load %arg1[%c0_1, %c0_2] : memref<16x512xbf16, #tpu.memory_space<vmem>>, vector<16x512xbf16>
    %cst = arith.constant dense<0.000000e+00> : vector<64x512xf32>
    %2 = tpu.matmul %0, %1, %cst {dimension_numbers = #tpu.dot_dimension_numbers<[1], [0], [0], [1], [0, 0, 1, 1], [], []>} : vector<64x16xbf16>, vector<16x512xbf16>, vector<64x512xf32> -> vector<64x512xf32>
    %c0_3 = arith.constant 0 : index
    %c0_4 = arith.constant 0 : index
    %3 = vector.load %arg3[%c0_3, %c0_4] : memref<1x512xf32, #tpu.memory_space<vmem>>, vector<1x512xf32>
    %4 = vector.broadcast %3 : vector<1x512xf32> to vector<64x512xf32>
    %5 = arith.addf %2, %4 : vector<64x512xf32>
    %c0_5 = arith.constant 0 : index
    %c0_6 = arith.constant 0 : index
    %6 = vector.load %arg6[%c0_5, %c0_6] : memref<64x512xf32, #tpu.memory_space<vmem>>, vector<64x512xf32>
    tpu.vector_store %arg6[%c0_5, %c0_6], %5 {strides = array<i32>} : memref<64x512xf32, #tpu.memory_space<vmem>>, vector<64x512xf32>,
    %c0_7 = arith.constant 0 : index
    %c0_8 = arith.constant 0 : index
    %7 = vector.load %arg2[%c0_7, %c0_8] : memref<128x512xbf16, #tpu.memory_space<vmem>>, vector<128x512xbf16>
    %cst_9 = arith.constant 0.000000e+00 : f32
    %8 = vector.broadcast %cst_9 : f32 to vector<8x128xf32>
    %cst_10 = arith.constant 0.000000e+00 : f32
    %9 = vector.broadcast %cst_10 : f32 to vector<8x128xf32>
    %c0_i32 = arith.constant 0 : i32
    %c8_i32 = arith.constant 8 : i32
    %10 = arith.muli %c0_i32, %c8_i32 : i32
    %11 = tpu.assume_multiple %10, 8 : i32
    %12 = arith.truncf %8 : vector<8x128xf32> to vector<8x128xbf16>
    %cst_11 = arith.constant dense<0.000000e+00> : vector<8x512xf32>
    %13 = tpu.matmul %12, %7, %cst_11 {dimension_numbers = #tpu.dot_dimension_numbers<[1], [0], [0], [1], [0, 0, 1, 1], [], []>} : vector<8x128xbf16>, vector<128x512xbf16>, vector<8x512xf32> -> vector<8x512xf32>
    %14 = arith.index_cast %11 : i32 to index
    %c0_12 = arith.constant 0 : index
    %15 = vector.load %arg6[%14, %c0_12] : memref<64x512xf32, #tpu.memory_space<vmem>>, vector<8x512xf32>
    %16 = arith.addf %13, %15 : vector<8x512xf32>
    %17 = vector.extract_strided_slice %16 {offsets = [0, 0], sizes = [8, 128], strides = [1, 1]} : vector<8x512xf32> to vector<8x128xf32>
    %18 = arith.negf %17 : vector<8x128xf32>
    %19 = math.exp %18 : vector<8x128xf32>
    %cst_13 = arith.constant 1.000000e+00 : f32
    %20 = vector.broadcast %cst_13 : f32 to vector<8x128xf32>
    %21 = arith.addf %20, %19 : vector<8x128xf32>
    %22 = arith.divf %20, %21 : vector<8x128xf32>
    %23 = vector.extract_strided_slice %16 {offsets = [0, 128], sizes = [8, 128], strides = [1, 1]} : vector<8x512xf32> to vector<8x128xf32>
    %24 = arith.negf %23 : vector<8x128xf32>
    %25 = math.exp %24 : vector<8x128xf32>
    %cst_14 = arith.constant 1.000000e+00 : f32
    %26 = vector.broadcast %cst_14 : f32 to vector<8x128xf32>
    %27 = arith.addf %26, %25 : vector<8x128xf32>
    %28 = arith.divf %26, %27 : vector<8x128xf32>
    %29 = vector.extract_strided_slice %16 {offsets = [0, 256], sizes = [8, 128], strides = [1, 1]} : vector<8x512xf32> to vector<8x128xf32>
    %30 = math.tanh %29 : vector<8x128xf32>
    %31 = vector.extract_strided_slice %16 {offsets = [0, 384], sizes = [8, 128], strides = [1, 1]} : vector<8x512xf32> to vector<8x128xf32>
    %32 = arith.negf %31 : vector<8x128xf32>
    %33 = math.exp %32 : vector<8x128xf32>
    %cst_15 = arith.constant 1.000000e+00 : f32
    %34 = vector.broadcast %cst_15 : f32 to vector<8x128xf32>
    %35 = arith.addf %34, %33 : vector<8x128xf32>
    %36 = arith.divf %34, %35 : vector<8x128xf32>
    %37 = arith.mulf %28, %9 : vector<8x128xf32>
    %38 = arith.mulf %22, %30 : vector<8x128xf32>
    %39 = arith.addf %37, %38 : vector<8x128xf32>
    %40 = math.tanh %39 : vector<8x128xf32>
    %41 = arith.mulf %36, %40 : vector<8x128xf32>
    %c1_i32 = arith.constant 1 : i32
    %c8_i32_16 = arith.constant 8 : i32
    %42 = arith.muli %c1_i32, %c8_i32_16 : i32
    %43 = tpu.assume_multiple %42, 8 : i32
    %44 = arith.truncf %41 : vector<8x128xf32> to vector<8x128xbf16>
    %cst_17 = arith.constant dense<0.000000e+00> : vector<8x512xf32>
    %45 = tpu.matmul %44, %7, %cst_17 {dimension_numbers = #tpu.dot_dimension_numbers<[1], [0], [0], [1], [0, 0, 1, 1], [], []>} : vector<8x128xbf16>, vector<128x512xbf16>, vector<8x512xf32> -> vector<8x512xf32>
    %46 = arith.index_cast %43 : i32 to index
    %c0_18 = arith.constant 0 : index
    %47 = vector.load %arg6[%46, %c0_18] : memref<64x512xf32, #tpu.memory_space<vmem>>, vector<8x512xf32>
    %48 = arith.addf %45, %47 : vector<8x512xf32>
    %49 = vector.extract_strided_slice %48 {offsets = [0, 0], sizes = [8, 128], strides = [1, 1]} : vector<8x512xf32> to vector<8x128xf32>
    %50 = arith.negf %49 : vector<8x128xf32>
    %51 = math.exp %50 : vector<8x128xf32>
    %cst_19 = arith.constant 1.000000e+00 : f32
    %52 = vector.broadcast %cst_19 : f32 to vector<8x128xf32>
    %53 = arith.addf %52, %51 : vector<8x128xf32>
    %54 = arith.divf %52, %53 : vector<8x128xf32>
    %55 = vector.extract_strided_slice %48 {offsets = [0, 128], sizes = [8, 128], strides = [1, 1]} : vector<8x512xf32> to vector<8x128xf32>
    %56 = arith.negf %55 : vector<8x128xf32>
    %57 = math.exp %56 : vector<8x128xf32>
    %cst_20 = arith.constant 1.000000e+00 : f32
    %58 = vector.broadcast %cst_20 : f32 to vector<8x128xf32>
    %59 = arith.addf %58, %57 : vector<8x128xf32>
    %60 = arith.divf %58, %59 : vector<8x128xf32>
    %61 = vector.extract_strided_slice %48 {offsets = [0, 256], sizes = [8, 128], strides = [1, 1]} : vector<8x512xf32> to vector<8x128xf32>
    %62 = math.tanh %61 : vector<8x128xf32>
    %63 = vector.extract_strided_slice %48 {offsets = [0, 384], sizes = [8, 128], strides = [1, 1]} : vector<8x512xf32> to vector<8x128xf32>
    %64 = arith.negf %63 : vector<8x128xf32>
    %65 = math.exp %64 : vector<8x128xf32>
    %cst_21 = arith.constant 1.000000e+00 : f32
    %66 = vector.broadcast %cst_21 : f32 to vector<8x128xf32>
    %67 = arith.addf %66, %65 : vector<8x128xf32>
    %68 = arith.divf %66, %67 : vector<8x128xf32>
    %69 = arith.mulf %60, %39 : vector<8x128xf32>
    %70 = arith.mulf %54, %62 : vector<8x128xf32>
    %71 = arith.addf %69, %70 : vector<8x128xf32>
    %72 = math.tanh %71 : vector<8x128xf32>
    %73 = arith.mulf %68, %72 : vector<8x128xf32>
    %c2_i32 = arith.constant 2 : i32
    %c8_i32_22 = arith.constant 8 : i32
    %74 = arith.muli %c2_i32, %c8_i32_22 : i32
    %75 = tpu.assume_multiple %74, 8 : i32
    %76 = arith.truncf %73 : vector<8x128xf32> to vector<8x128xbf16>
    %cst_23 = arith.constant dense<0.000000e+00> : vector<8x512xf32>
    %77 = tpu.matmul %76, %7, %cst_23 {dimension_numbers = #tpu.dot_dimension_numbers<[1], [0], [0], [1], [0, 0, 1, 1], [], []>} : vector<8x128xbf16>, vector<128x512xbf16>, vector<8x512xf32> -> vector<8x512xf32>
    %78 = arith.index_cast %75 : i32 to index
    %c0_24 = arith.constant 0 : index
    %79 = vector.load %arg6[%78, %c0_24] : memref<64x512xf32, #tpu.memory_space<vmem>>, vector<8x512xf32>
    %80 = arith.addf %77, %79 : vector<8x512xf32>
    %81 = vector.extract_strided_slice %80 {offsets = [0, 0], sizes = [8, 128], strides = [1, 1]} : vector<8x512xf32> to vector<8x128xf32>
    %82 = arith.negf %81 : vector<8x128xf32>
    %83 = math.exp %82 : vector<8x128xf32>
    %cst_25 = arith.constant 1.000000e+00 : f32
    %84 = vector.broadcast %cst_25 : f32 to vector<8x128xf32>
    %85 = arith.addf %84, %83 : vector<8x128xf32>
    %86 = arith.divf %84, %85 : vector<8x128xf32>
    %87 = vector.extract_strided_slice %80 {offsets = [0, 128], sizes = [8, 128], strides = [1, 1]} : vector<8x512xf32> to vector<8x128xf32>
    %88 = arith.negf %87 : vector<8x128xf32>
    %89 = math.exp %88 : vector<8x128xf32>
    %cst_26 = arith.constant 1.000000e+00 : f32
    %90 = vector.broadcast %cst_26 : f32 to vector<8x128xf32>
    %91 = arith.addf %90, %89 : vector<8x128xf32>
    %92 = arith.divf %90, %91 : vector<8x128xf32>
    %93 = vector.extract_strided_slice %80 {offsets = [0, 256], sizes = [8, 128], strides = [1, 1]} : vector<8x512xf32> to vector<8x128xf32>
    %94 = math.tanh %93 : vector<8x128xf32>
    %95 = vector.extract_strided_slice %80 {offsets = [0, 384], sizes = [8, 128], strides = [1, 1]} : vector<8x512xf32> to vector<8x128xf32>
    %96 = arith.negf %95 : vector<8x128xf32>
    %97 = math.exp %96 : vector<8x128xf32>
    %cst_27 = arith.constant 1.000000e+00 : f32
    %98 = vector.broadcast %cst_27 : f32 to vector<8x128xf32>
    %99 = arith.addf %98, %97 : vector<8x128xf32>
    %100 = arith.divf %98, %99 : vector<8x128xf32>
    %101 = arith.mulf %92, %71 : vector<8x128xf32>
    %102 = arith.mulf %86, %94 : vector<8x128xf32>
    %103 = arith.addf %101, %102 : vector<8x128xf32>
    %104 = math.tanh %103 : vector<8x128xf32>
    %105 = arith.mulf %100, %104 : vector<8x128xf32>
    %c3_i32 = arith.constant 3 : i32
    %c8_i32_28 = arith.constant 8 : i32
    %106 = arith.muli %c3_i32, %c8_i32_28 : i32
    %107 = tpu.assume_multiple %106, 8 : i32
    %108 = arith.truncf %105 : vector<8x128xf32> to vector<8x128xbf16>
    %cst_29 = arith.constant dense<0.000000e+00> : vector<8x512xf32>
    %109 = tpu.matmul %108, %7, %cst_29 {dimension_numbers = #tpu.dot_dimension_numbers<[1], [0], [0], [1], [0, 0, 1, 1], [], []>} : vector<8x128xbf16>, vector<128x512xbf16>, vector<8x512xf32> -> vector<8x512xf32>
    %110 = arith.index_cast %107 : i32 to index
    %c0_30 = arith.constant 0 : index
    %111 = vector.load %arg6[%110, %c0_30] : memref<64x512xf32, #tpu.memory_space<vmem>>, vector<8x512xf32>
    %112 = arith.addf %109, %111 : vector<8x512xf32>
    %113 = vector.extract_strided_slice %112 {offsets = [0, 0], sizes = [8, 128], strides = [1, 1]} : vector<8x512xf32> to vector<8x128xf32>
    %114 = arith.negf %113 : vector<8x128xf32>
    %115 = math.exp %114 : vector<8x128xf32>
    %cst_31 = arith.constant 1.000000e+00 : f32
    %116 = vector.broadcast %cst_31 : f32 to vector<8x128xf32>
    %117 = arith.addf %116, %115 : vector<8x128xf32>
    %118 = arith.divf %116, %117 : vector<8x128xf32>
    %119 = vector.extract_strided_slice %112 {offsets = [0, 128], sizes = [8, 128], strides = [1, 1]} : vector<8x512xf32> to vector<8x128xf32>
    %120 = arith.negf %119 : vector<8x128xf32>
    %121 = math.exp %120 : vector<8x128xf32>
    %cst_32 = arith.constant 1.000000e+00 : f32
    %122 = vector.broadcast %cst_32 : f32 to vector<8x128xf32>
    %123 = arith.addf %122, %121 : vector<8x128xf32>
    %124 = arith.divf %122, %123 : vector<8x128xf32>
    %125 = vector.extract_strided_slice %112 {offsets = [0, 256], sizes = [8, 128], strides = [1, 1]} : vector<8x512xf32> to vector<8x128xf32>
    %126 = math.tanh %125 : vector<8x128xf32>
    %127 = vector.extract_strided_slice %112 {offsets = [0, 384], sizes = [8, 128], strides = [1, 1]} : vector<8x512xf32> to vector<8x128xf32>
    %128 = arith.negf %127 : vector<8x128xf32>
    %129 = math.exp %128 : vector<8x128xf32>
    %cst_33 = arith.constant 1.000000e+00 : f32
    %130 = vector.broadcast %cst_33 : f32 to vector<8x128xf32>
    %131 = arith.addf %130, %129 : vector<8x128xf32>
    %132 = arith.divf %130, %131 : vector<8x128xf32>
    %133 = arith.mulf %124, %103 : vector<8x128xf32>
    %134 = arith.mulf %118, %126 : vector<8x128xf32>
    %135 = arith.addf %133, %134 : vector<8x128xf32>
    %136 = math.tanh %135 : vector<8x128xf32>
    %137 = arith.mulf %132, %136 : vector<8x128xf32>
    %c4_i32 = arith.constant 4 : i32
    %c8_i32_34 = arith.constant 8 : i32
    %138 = arith.muli %c4_i32, %c8_i32_34 : i32
    %139 = tpu.assume_multiple %138, 8 : i32
    %140 = arith.truncf %137 : vector<8x128xf32> to vector<8x128xbf16>
    %cst_35 = arith.constant dense<0.000000e+00> : vector<8x512xf32>
    %141 = tpu.matmul %140, %7, %cst_35 {dimension_numbers = #tpu.dot_dimension_numbers<[1], [0], [0], [1], [0, 0, 1, 1], [], []>} : vector<8x128xbf16>, vector<128x512xbf16>, vector<8x512xf32> -> vector<8x512xf32>
    %142 = arith.index_cast %139 : i32 to index
    %c0_36 = arith.constant 0 : index
    %143 = vector.load %arg6[%142, %c0_36] : memref<64x512xf32, #tpu.memory_space<vmem>>, vector<8x512xf32>
    %144 = arith.addf %141, %143 : vector<8x512xf32>
    %145 = vector.extract_strided_slice %144 {offsets = [0, 0], sizes = [8, 128], strides = [1, 1]} : vector<8x512xf32> to vector<8x128xf32>
    %146 = arith.negf %145 : vector<8x128xf32>
    %147 = math.exp %146 : vector<8x128xf32>
    %cst_37 = arith.constant 1.000000e+00 : f32
    %148 = vector.broadcast %cst_37 : f32 to vector<8x128xf32>
    %149 = arith.addf %148, %147 : vector<8x128xf32>
    %150 = arith.divf %148, %149 : vector<8x128xf32>
    %151 = vector.extract_strided_slice %144 {offsets = [0, 128], sizes = [8, 128], strides = [1, 1]} : vector<8x512xf32> to vector<8x128xf32>
    %152 = arith.negf %151 : vector<8x128xf32>
    %153 = math.exp %152 : vector<8x128xf32>
    %cst_38 = arith.constant 1.000000e+00 : f32
    %154 = vector.broadcast %cst_38 : f32 to vector<8x128xf32>
    %155 = arith.addf %154, %153 : vector<8x128xf32>
    %156 = arith.divf %154, %155 : vector<8x128xf32>
    %157 = vector.extract_strided_slice %144 {offsets = [0, 256], sizes = [8, 128], strides = [1, 1]} : vector<8x512xf32> to vector<8x128xf32>
    %158 = math.tanh %157 : vector<8x128xf32>
    %159 = vector.extract_strided_slice %144 {offsets = [0, 384], sizes = [8, 128], strides = [1, 1]} : vector<8x512xf32> to vector<8x128xf32>
    %160 = arith.negf %159 : vector<8x128xf32>
    %161 = math.exp %160 : vector<8x128xf32>
    %cst_39 = arith.constant 1.000000e+00 : f32
    %162 = vector.broadcast %cst_39 : f32 to vector<8x128xf32>
    %163 = arith.addf %162, %161 : vector<8x128xf32>
    %164 = arith.divf %162, %163 : vector<8x128xf32>
    %165 = arith.mulf %156, %135 : vector<8x128xf32>
    %166 = arith.mulf %150, %158 : vector<8x128xf32>
    %167 = arith.addf %165, %166 : vector<8x128xf32>
    %168 = math.tanh %167 : vector<8x128xf32>
    %169 = arith.mulf %164, %168 : vector<8x128xf32>
    %c5_i32 = arith.constant 5 : i32
    %c8_i32_40 = arith.constant 8 : i32
    %170 = arith.muli %c5_i32, %c8_i32_40 : i32
    %171 = tpu.assume_multiple %170, 8 : i32
    %172 = arith.truncf %169 : vector<8x128xf32> to vector<8x128xbf16>
    %cst_41 = arith.constant dense<0.000000e+00> : vector<8x512xf32>
    %173 = tpu.matmul %172, %7, %cst_41 {dimension_numbers = #tpu.dot_dimension_numbers<[1], [0], [0], [1], [0, 0, 1, 1], [], []>} : vector<8x128xbf16>, vector<128x512xbf16>, vector<8x512xf32> -> vector<8x512xf32>
    %174 = arith.index_cast %171 : i32 to index
    %c0_42 = arith.constant 0 : index
    %175 = vector.load %arg6[%174, %c0_42] : memref<64x512xf32, #tpu.memory_space<vmem>>, vector<8x512xf32>
    %176 = arith.addf %173, %175 : vector<8x512xf32>
    %177 = vector.extract_strided_slice %176 {offsets = [0, 0], sizes = [8, 128], strides = [1, 1]} : vector<8x512xf32> to vector<8x128xf32>
    %178 = arith.negf %177 : vector<8x128xf32>
    %179 = math.exp %178 : vector<8x128xf32>
    %cst_43 = arith.constant 1.000000e+00 : f32
    %180 = vector.broadcast %cst_43 : f32 to vector<8x128xf32>
    %181 = arith.addf %180, %179 : vector<8x128xf32>
    %182 = arith.divf %180, %181 : vector<8x128xf32>
    %183 = vector.extract_strided_slice %176 {offsets = [0, 128], sizes = [8, 128], strides = [1, 1]} : vector<8x512xf32> to vector<8x128xf32>
    %184 = arith.negf %183 : vector<8x128xf32>
    %185 = math.exp %184 : vector<8x128xf32>
    %cst_44 = arith.constant 1.000000e+00 : f32
    %186 = vector.broadcast %cst_44 : f32 to vector<8x128xf32>
    %187 = arith.addf %186, %185 : vector<8x128xf32>
    %188 = arith.divf %186, %187 : vector<8x128xf32>
    %189 = vector.extract_strided_slice %176 {offsets = [0, 256], sizes = [8, 128], strides = [1, 1]} : vector<8x512xf32> to vector<8x128xf32>
    %190 = math.tanh %189 : vector<8x128xf32>
    %191 = vector.extract_strided_slice %176 {offsets = [0, 384], sizes = [8, 128], strides = [1, 1]} : vector<8x512xf32> to vector<8x128xf32>
    %192 = arith.negf %191 : vector<8x128xf32>
    %193 = math.exp %192 : vector<8x128xf32>
    %cst_45 = arith.constant 1.000000e+00 : f32
    %194 = vector.broadcast %cst_45 : f32 to vector<8x128xf32>
    %195 = arith.addf %194, %193 : vector<8x128xf32>
    %196 = arith.divf %194, %195 : vector<8x128xf32>
    %197 = arith.mulf %188, %167 : vector<8x128xf32>
    %198 = arith.mulf %182, %190 : vector<8x128xf32>
    %199 = arith.addf %197, %198 : vector<8x128xf32>
    %200 = math.tanh %199 : vector<8x128xf32>
    %201 = arith.mulf %196, %200 : vector<8x128xf32>
    %c6_i32 = arith.constant 6 : i32
    %c8_i32_46 = arith.constant 8 : i32
    %202 = arith.muli %c6_i32, %c8_i32_46 : i32
    %203 = tpu.assume_multiple %202, 8 : i32
    %204 = arith.truncf %201 : vector<8x128xf32> to vector<8x128xbf16>
    %cst_47 = arith.constant dense<0.000000e+00> : vector<8x512xf32>
    %205 = tpu.matmul %204, %7, %cst_47 {dimension_numbers = #tpu.dot_dimension_numbers<[1], [0], [0], [1], [0, 0, 1, 1], [], []>} : vector<8x128xbf16>, vector<128x512xbf16>, vector<8x512xf32> -> vector<8x512xf32>
    %206 = arith.index_cast %203 : i32 to index
    %c0_48 = arith.constant 0 : index
    %207 = vector.load %arg6[%206, %c0_48] : memref<64x512xf32, #tpu.memory_space<vmem>>, vector<8x512xf32>
    %208 = arith.addf %205, %207 : vector<8x512xf32>
    %209 = vector.extract_strided_slice %208 {offsets = [0, 0], sizes = [8, 128], strides = [1, 1]} : vector<8x512xf32> to vector<8x128xf32>
    %210 = arith.negf %209 : vector<8x128xf32>
    %211 = math.exp %210 : vector<8x128xf32>
    %cst_49 = arith.constant 1.000000e+00 : f32
    %212 = vector.broadcast %cst_49 : f32 to vector<8x128xf32>
    %213 = arith.addf %212, %211 : vector<8x128xf32>
    %214 = arith.divf %212, %213 : vector<8x128xf32>
    %215 = vector.extract_strided_slice %208 {offsets = [0, 128], sizes = [8, 128], strides = [1, 1]} : vector<8x512xf32> to vector<8x128xf32>
    %216 = arith.negf %215 : vector<8x128xf32>
    %217 = math.exp %216 : vector<8x128xf32>
    %cst_50 = arith.constant 1.000000e+00 : f32
    %218 = vector.broadcast %cst_50 : f32 to vector<8x128xf32>
    %219 = arith.addf %218, %217 : vector<8x128xf32>
    %220 = arith.divf %218, %219 : vector<8x128xf32>
    %221 = vector.extract_strided_slice %208 {offsets = [0, 256], sizes = [8, 128], strides = [1, 1]} : vector<8x512xf32> to vector<8x128xf32>
    %222 = math.tanh %221 : vector<8x128xf32>
    %223 = vector.extract_strided_slice %208 {offsets = [0, 384], sizes = [8, 128], strides = [1, 1]} : vector<8x512xf32> to vector<8x128xf32>
    %224 = arith.negf %223 : vector<8x128xf32>
    %225 = math.exp %224 : vector<8x128xf32>
    %cst_51 = arith.constant 1.000000e+00 : f32
    %226 = vector.broadcast %cst_51 : f32 to vector<8x128xf32>
    %227 = arith.addf %226, %225 : vector<8x128xf32>
    %228 = arith.divf %226, %227 : vector<8x128xf32>
    %229 = arith.mulf %220, %199 : vector<8x128xf32>
    %230 = arith.mulf %214, %222 : vector<8x128xf32>
    %231 = arith.addf %229, %230 : vector<8x128xf32>
    %232 = math.tanh %231 : vector<8x128xf32>
    %233 = arith.mulf %228, %232 : vector<8x128xf32>
    %c7_i32 = arith.constant 7 : i32
    %c8_i32_52 = arith.constant 8 : i32
    %234 = arith.muli %c7_i32, %c8_i32_52 : i32
    %235 = tpu.assume_multiple %234, 8 : i32
    %236 = arith.truncf %233 : vector<8x128xf32> to vector<8x128xbf16>
    %cst_53 = arith.constant dense<0.000000e+00> : vector<8x512xf32>
    %237 = tpu.matmul %236, %7, %cst_53 {dimension_numbers = #tpu.dot_dimension_numbers<[1], [0], [0], [1], [0, 0, 1, 1], [], []>} : vector<8x128xbf16>, vector<128x512xbf16>, vector<8x512xf32> -> vector<8x512xf32>
    %238 = arith.index_cast %235 : i32 to index
    %c0_54 = arith.constant 0 : index
    %239 = vector.load %arg6[%238, %c0_54] : memref<64x512xf32, #tpu.memory_space<vmem>>, vector<8x512xf32>
    %240 = arith.addf %237, %239 : vector<8x512xf32>
    %241 = vector.extract_strided_slice %240 {offsets = [0, 0], sizes = [8, 128], strides = [1, 1]} : vector<8x512xf32> to vector<8x128xf32>
    %242 = arith.negf %241 : vector<8x128xf32>
    %243 = math.exp %242 : vector<8x128xf32>
    %cst_55 = arith.constant 1.000000e+00 : f32
    %244 = vector.broadcast %cst_55 : f32 to vector<8x128xf32>
    %245 = arith.addf %244, %243 : vector<8x128xf32>
    %246 = arith.divf %244, %245 : vector<8x128xf32>
    %247 = vector.extract_strided_slice %240 {offsets = [0, 128], sizes = [8, 128], strides = [1, 1]} : vector<8x512xf32> to vector<8x128xf32>
    %248 = arith.negf %247 : vector<8x128xf32>
    %249 = math.exp %248 : vector<8x128xf32>
    %cst_56 = arith.constant 1.000000e+00 : f32
    %250 = vector.broadcast %cst_56 : f32 to vector<8x128xf32>
    %251 = arith.addf %250, %249 : vector<8x128xf32>
    %252 = arith.divf %250, %251 : vector<8x128xf32>
    %253 = vector.extract_strided_slice %240 {offsets = [0, 256], sizes = [8, 128], strides = [1, 1]} : vector<8x512xf32> to vector<8x128xf32>
    %254 = math.tanh %253 : vector<8x128xf32>
    %255 = vector.extract_strided_slice %240 {offsets = [0, 384], sizes = [8, 128], strides = [1, 1]} : vector<8x512xf32> to vector<8x128xf32>
    %256 = arith.negf %255 : vector<8x128xf32>
    %257 = math.exp %256 : vector<8x128xf32>
    %cst_57 = arith.constant 1.000000e+00 : f32
    %258 = vector.broadcast %cst_57 : f32 to vector<8x128xf32>
    %259 = arith.addf %258, %257 : vector<8x128xf32>
    %260 = arith.divf %258, %259 : vector<8x128xf32>
    %261 = arith.mulf %252, %231 : vector<8x128xf32>
    %262 = arith.mulf %246, %254 : vector<8x128xf32>
    %263 = arith.addf %261, %262 : vector<8x128xf32>
    %264 = math.tanh %263 : vector<8x128xf32>
    %265 = arith.mulf %260, %264 : vector<8x128xf32>
    %c8_i32_58 = arith.constant 8 : i32
    %c0_59 = arith.constant 0 : index
    %c0_60 = arith.constant 0 : index
    %266 = vector.load %arg4[%c0_59, %c0_60] : memref<8x128xf32, #tpu.memory_space<vmem>>, vector<8x128xf32>
    tpu.vector_store %arg4[%c0_59, %c0_60], %265 {strides = array<i32>} : memref<8x128xf32, #tpu.memory_space<vmem>>, vector<8x128xf32>,
    %c0_61 = arith.constant 0 : index
    %c0_62 = arith.constant 0 : index
    %267 = vector.load %arg5[%c0_61, %c0_62] : memref<8x128xf32, #tpu.memory_space<vmem>>, vector<8x128xf32>
    tpu.vector_store %arg5[%c0_61, %c0_62], %263 {strides = array<i32>} : memref<8x128xf32, #tpu.memory_space<vmem>>, vector<8x128xf32>,
    return
  }
}

</mosaic_0001>

<llo_original>
// kernel: tpu_custom_call.1
$region0: #{tpu_custom_call.1}
  #allocation0 [shape = 'u32[]', space=smem, size = 0x4, offset = 0x4, fixed_abs, tag = 'smem constant byte address 0x4 - core index']
  #allocation1 [shape = 'u32[144,128]{1,0:T(1,128)}', space=vmem, size = 0x12000, scoped, tag = 'internal scratch']
  #allocation2 [shape = 'f32[64,512]{1,0:T(8,128)}', space=vmem, size = 0x20000, scoped, tag = 'scratch operand']
  %s0 = inlined_call_operand.hbm [shape: bf16[64,16], index: 0, kind: input, shape index: {}]
  %s1 = inlined_call_operand.hbm [shape: bf16[16,512], index: 1, kind: input, shape index: {}]
  %s2 = inlined_call_operand.hbm [shape: bf16[128,512], index: 2, kind: input, shape index: {}]
  %s3 = inlined_call_operand.hbm [shape: f32[1,512], index: 3, kind: input, shape index: {}]
  %s4 = inlined_call_operand.hbm [shape: f32[8,128], index: 4, kind: output, shape index: {0}]
  %s5 = inlined_call_operand.hbm [shape: f32[8,128], index: 5, kind: output, shape index: {1}]
  %6 = xla_tuple %s4, %s5
  %s7 = sld [smem:[#allocation0]]
  $region50: #{tpu_custom_call.1} parent=0
    _
  %s9 = ssub.s32 1, %s7
  %s10 = scalar_select 0, %s9, %s7
  $region1: #{tpu_custom_call.1} parent=0
    #allocation3 [shape = 'u8[16384]{0}', space=vmem, size = 0x4000, scoped, tag = 'input window, operand 0, single buffered']
    #allocation4 [shape = 's32[1]{0}', space=sflag, size = 0x4, scoped, tag = 'scoped memory for tpu_custom_call.1']
    #allocation5 [shape = 's32[1]{0}', space=sflag, size = 0x4, scoped, tag = 'scoped memory for tpu_custom_call.1']
    #allocation6 [shape = 'u8[16384]{0}', space=vmem, size = 0x4000, scoped, tag = 'input window, operand 1, single buffered']
    #allocation7 [shape = 's32[1]{0}', space=sflag, size = 0x4, scoped, tag = 'scoped memory for tpu_custom_call.1']
    #allocation8 [shape = 'u8[131072]{0}', space=vmem, size = 0x20000, scoped, tag = 'input window, operand 2, single buffered']
    #allocation9 [shape = 'u8[2048]{0}', space=vmem, size = 0x800, scoped, tag = 'input window, operand 3, single buffered']
    #allocation10 [shape = 's32[1]{0}', space=sflag, size = 0x4, scoped, tag = 'scoped memory for tpu_custom_call.1']
    #allocation11 [shape = 'u8[4096]{0}', space=vmem, size = 0x1000, scoped, tag = 'output window, operand 0, single buffered']
    #allocation12 [shape = 'u8[4096]{0}', space=vmem, size = 0x1000, scoped, tag = 'output window, operand 1, single buffered']
    #allocation13 [shape = 's32[1]{0}', space=sflag, size = 0x4, scoped, tag = 'scoped memory for tpu_custom_call.1']
    %11 = vsyncpa [#allocation4], 0
    %12 = vsyncpa [#allocation7], 0
    %13 = vsyncpa [#allocation10], 0
    %14 = vsyncpa [#allocation5], 0
    %15 = vsyncpa [#allocation13], 0
    // Predicated region
    $region2: #{tpu_custom_call.1} parent=1 // pred_check
      _
    $region3: #{tpu_custom_call.1} parent=1 // pred_check_branch
      %17 = sbr.rel (0) target = $region5
    $region4: #{tpu_custom_call.1} parent=1 // pred_region
      %s19 = ssub.s32 512, 512
      %20 = vsyncadd [#allocation4], %s19
      %s21 = sshll.u32 [#allocation3], 4
      %s22 = int_to_ptr.vmem [resolvable:$true] %s21
      %27 = dma.hbm_to_vmem [thread:$0]  %s0, 512, %s22, [#allocation4], 64, 64, 4
    $region5: #{tpu_custom_call.1} parent=1 // pred_fallthru
      _
    // Predicated region
    $region6: #{tpu_custom_call.1} parent=1 // pred_check
      _
    $region7: #{tpu_custom_call.1} parent=1 // pred_check_branch
      %29 = sbr.rel (0) target = $region9
    $region8: #{tpu_custom_call.1} parent=1 // pred_region
      %s31 = ssub.s32 512, 512
      %32 = vsyncadd [#allocation7], %s31
      %s33 = sshll.u32 [#allocation6], 4
      %s34 = int_to_ptr.vmem [resolvable:$true] %s33
      %39 = dma.hbm_to_vmem [thread:$0]  %s1, 512, %s34, [#allocation7], 256, 256, 16
    $region9: #{tpu_custom_call.1} parent=1 // pred_fallthru
      _
    // Predicated region
    $region10: #{tpu_custom_call.1} parent=1 // pred_check
      _
    $region11: #{tpu_custom_call.1} parent=1 // pred_check_branch
      %41 = sbr.rel (0) target = $region13
    $region12: #{tpu_custom_call.1} parent=1 // pred_region
      %s43 = ssub.s32 4096, 4096
      %44 = vsyncadd [#allocation7], %s43
      %s45 = sshll.u32 [#allocation8], 4
      %s46 = int_to_ptr.vmem [resolvable:$true] %s45
      %51 = dma.hbm_to_vmem [thread:$0]  %s2, 4096, %s46, [#allocation7], 256, 256, 16
    $region13: #{tpu_custom_call.1} parent=1 // pred_fallthru
      _
    // Predicated region
    $region14: #{tpu_custom_call.1} parent=1 // pred_check
      _
    $region15: #{tpu_custom_call.1} parent=1 // pred_check_branch
      %53 = sbr.rel (0) target = $region17
    $region16: #{tpu_custom_call.1} parent=1 // pred_region
      %s55 = ssub.s32 64, 64
      %56 = vsyncadd [#allocation10], %s55
      %s58 = sshll.u32 [#allocation9], 4
      %s59 = int_to_ptr.vmem [resolvable:$true] %s58
      %61 = dma.hbm_to_vmem [thread:$0]  %s3, 64, %s59, [#allocation10]
    $region17: #{tpu_custom_call.1} parent=1 // pred_fallthru
      _
    // Predicated region
    $region18: #{tpu_custom_call.1} parent=1 // pred_check
      _
    $region19: #{tpu_custom_call.1} parent=1 // pred_check_branch
      %63 = sbr.rel (0) target = $region21
    $region20: #{tpu_custom_call.1} parent=1 // pred_region
      %64 = dma.done [#allocation4], 512
    $region21: #{tpu_custom_call.1} parent=1 // pred_fallthru
      _
    // Predicated region
    $region22: #{tpu_custom_call.1} parent=1 // pred_check
      _
    $region23: #{tpu_custom_call.1} parent=1 // pred_check_branch
      %66 = sbr.rel (0) target = $region25
    $region24: #{tpu_custom_call.1} parent=1 // pred_region
      %67 = dma.done [#allocation7], 512
    $region25: #{tpu_custom_call.1} parent=1 // pred_fallthru
      _
    // Predicated region
    $region26: #{tpu_custom_call.1} parent=1 // pred_check
      _
    $region27: #{tpu_custom_call.1} parent=1 // pred_check_branch
      %69 = sbr.rel (0) target = $region29
    $region28: #{tpu_custom_call.1} parent=1 // pred_region
      %70 = dma.done [#allocation7], 4096
    $region29: #{tpu_custom_call.1} parent=1 // pred_fallthru
      _
    // Predicated region
    $region30: #{tpu_custom_call.1} parent=1 // pred_check
      _
    $region31: #{tpu_custom_call.1} parent=1 // pred_check_branch
      %72 = sbr.rel (0) target = $region33
    $region32: #{tpu_custom_call.1} parent=1 // pred_region
      %73 = dma.done [#allocation10], 64
    $region33: #{tpu_custom_call.1} parent=1 // pred_fallthru
      _
    %v75 = vld [vmem:[#allocation3] sm:$0xf]
    %v76 = vld [vmem:[#allocation3 + $0x4] sm:$0xf]
    %v77 = vld [vmem:[#allocation3 + $0x8] sm:$0xf]
    %v78 = vld [vmem:[#allocation3 + $0xc] sm:$0xf]
    %v79 = vld [vmem:[#allocation3 + $0x10] sm:$0xf]
    %v80 = vld [vmem:[#allocation3 + $0x14] sm:$0xf]
    %v81 = vld [vmem:[#allocation3 + $0x18] sm:$0xf]
    %v82 = vld [vmem:[#allocation3 + $0x1c] sm:$0xf]
    %v83 = vld [vmem:[#allocation6] sm:$0xff]
    %v84 = vld [vmem:[#allocation6 + $0x8] sm:$0xff]
    %v85 = vld [vmem:[#allocation6 + $0x10] sm:$0xff]
    %v86 = vld [vmem:[#allocation6 + $0x18] sm:$0xff]
    %v87 = vld [vmem:[#allocation9] sm:$0xf]
    %v89 = vlaneseq
    %v90 = vshrl.u32 %v89, 7
    %v91 = vsub.s32 0, %v90
    %v92 = vrot.slane %v87, %v91
    %v93 = vlaneseq
    %v94 = vshrl.u32 %v93, 7
    %v95 = vsub.s32 1, %v94
    %v96 = vrot.slane %v87, %v95
    %v97 = vlaneseq
    %v98 = vshrl.u32 %v97, 7
    %v99 = vsub.s32 2, %v98
    %v100 = vrot.slane %v87, %v99
    %v101 = vlaneseq
    %v102 = vshrl.u32 %v101, 7
    %v103 = vsub.s32 3, %v102
    %v104 = vrot.slane %v87, %v103
    %v117 = vunpack.c.l.b16 %v75
    %v118 = vunpack.c.l.b16 %v76
    %v119 = vunpack.c.l.b16 %v77
    %v120 = vunpack.c.l.b16 %v78
    %v121 = vunpack.c.l.b16 %v79
    %v122 = vunpack.c.l.b16 %v80
    %v123 = vunpack.c.l.b16 %v81
    %v124 = vunpack.c.l.b16 %v82
    %v125 = vpack.c.b16 %v118, %v117
    %v126 = vpack.c.b16 %v120, %v119
    %v127 = vpack.c.b16 %v122, %v121
    %v128 = vpack.c.b16 %v124, %v123
    %v133 = vunpack.c.l.b16 %v83
    %v134 = vunpack.c.h.b16 %v83
    %v135 = vunpack.c.l.b16 %v84
    %v136 = vunpack.c.h.b16 %v84
    %v137 = vunpack.c.l.b16 %v85
    %v138 = vunpack.c.h.b16 %v85
    %v139 = vunpack.c.l.b16 %v86
    %v140 = vunpack.c.h.b16 %v86
    %v141 = vpack.c.b16 %v137, %v133
    %v142 = vpack.c.b16 %v138, %v134
    %v143 = vpack.c.b16 %v139, %v135
    %v144 = vpack.c.b16 %v140, %v136
    %vm149 = vcmask 130048
    %v151 = vsel %vm149, %v125, 0
    %v154 = vsel %vm149, %v126, 0
    %v157 = vsel %vm149, %v127, 0
    %v160 = vsel %vm149, %v128, 0
    %162 = vmatprep.subr.bf16.mxu0 %v142
    %163 = vmatpush1.bf16.msra.mxu0 %v141
    %164 = vmatprep.subr.bf16.mxu0 0
    %165 = vmatpush1.bf16.msra.mxu0 0
    %166 = vmatprep.subr.bf16.mxu0 0
    %167 = vmatpush1.bf16.msra.mxu0 0
    %168 = vmatprep.subr.bf16.mxu0 0
    %169 = vmatpush1.bf16.msra.mxu0 0
    %170 = vmatprep.subr.bf16.mxu0 0
    %171 = vmatpush1.bf16.msra.mxu0 0
    %172 = vmatprep.subr.bf16.mxu0 0
    %173 = vmatpush1.bf16.msra.mxu0 0
    %174 = vmatprep.subr.bf16.mxu0 0
    %175 = vmatpush1.bf16.msra.mxu0 0
    %176 = vmatprep.subr.bf16.mxu0 0
    %177 = vmatpush1.bf16.msra.mxu0 0
    %178 = vmatprep.subr.bf16.mxu0 0
    %179 = vmatpush1.bf16.msra.mxu0 0
    %180 = vmatprep.subr.bf16.mxu0 0
    %181 = vmatpush1.bf16.msra.mxu0 0
    %182 = vmatprep.subr.bf16.mxu0 0
    %183 = vmatpush1.bf16.msra.mxu0 0
    %184 = vmatprep.subr.bf16.mxu0 0
    %185 = vmatpush1.bf16.msra.mxu0 0
    %186 = vmatprep.subr.bf16.mxu0 0
    %187 = vmatpush1.bf16.msra.mxu0 0
    %188 = vmatprep.subr.bf16.mxu0 0
    %189 = vmatpush1.bf16.msra.mxu0 0
    %190 = vmatprep.subr.bf16.mxu0 0
    %191 = vmatpush1.bf16.msra.mxu0 0
    %192 = vmatprep.subr.bf16.mxu0 0
    %193 = vmatpush1.bf16.msra.mxu0 0
    %194 = vmatprep.mubr.bf16.mxu0 0
    %195 = vmatmul.mubr.bf16.gmra.mrb[0].mxu0 %v151
    %v196 = vpop.f32.mrb[0].mxu0
    %v197 = vadd.f32 %v92, %v196
    %v198 = vpop.f32.mrb[0].mxu0
    %v199 = vadd.f32 %v96, %v198
    %v200 = vpop.f32.mrb[0].mxu0
    %v201 = vadd.f32 %v92, %v200
    %v202 = vpop.f32.mrb[0].mxu0
    %v203 = vadd.f32 %v96, %v202
    %204 = vmatprep.mubr.bf16.mxu0 0
    %205 = vmatmul.mubr.bf16.gmra.mrb[0].mxu0 %v154
    %v206 = vpop.f32.mrb[0].mxu0
    %v207 = vadd.f32 %v92, %v206
    %v208 = vpop.f32.mrb[0].mxu0
    %v209 = vadd.f32 %v96, %v208
    %v210 = vpop.f32.mrb[0].mxu0
    %v211 = vadd.f32 %v92, %v210
    %v212 = vpop.f32.mrb[0].mxu0
    %v213 = vadd.f32 %v96, %v212
    %214 = vmatprep.mubr.bf16.mxu0 0
    %215 = vmatmul.mubr.bf16.gmra.mrb[0].mxu0 %v157
    %v216 = vpop.f32.mrb[0].mxu0
    %v217 = vadd.f32 %v92, %v216
    %v218 = vpop.f32.mrb[0].mxu0
    %v219 = vadd.f32 %v96, %v218
    %v220 = vpop.f32.mrb[0].mxu0
    %v221 = vadd.f32 %v92, %v220
    %v222 = vpop.f32.mrb[0].mxu0
    %v223 = vadd.f32 %v96, %v222
    %224 = vmatprep.mubr.bf16.mxu0 0
    %225 = vmatmul.mubr.bf16.gmra.mrb[0].mxu0 %v160
    %v226 = vpop.f32.mrb[0].mxu0
    %v227 = vadd.f32 %v92, %v226
    %v228 = vpop.f32.mrb[0].mxu0
    %v229 = vadd.f32 %v96, %v228
    %v230 = vpop.f32.mrb[0].mxu0
    %v231 = vadd.f32 %v92, %v230
    %v232 = vpop.f32.mrb[0].mxu0
    %v233 = vadd.f32 %v96, %v232
    %234 = vdwg.mxu0
    %235 = vmatprep.subr.bf16.mxu0 %v144
    %236 = vmatpush1.bf16.msra.mxu0 %v143
    %237 = vmatprep.subr.bf16.mxu0 0
    %238 = vmatpush1.bf16.msra.mxu0 0
    %239 = vmatprep.subr.bf16.mxu0 0
    %240 = vmatpush1.bf16.msra.mxu0 0
    %241 = vmatprep.subr.bf16.mxu0 0
    %242 = vmatpush1.bf16.msra.mxu0 0
    %243 = vmatprep.subr.bf16.mxu0 0
    %244 = vmatpush1.bf16.msra.mxu0 0
    %245 = vmatprep.subr.bf16.mxu0 0
    %246 = vmatpush1.bf16.msra.mxu0 0
    %247 = vmatprep.subr.bf16.mxu0 0
    %248 = vmatpush1.bf16.msra.mxu0 0
    %249 = vmatprep.subr.bf16.mxu0 0
    %250 = vmatpush1.bf16.msra.mxu0 0
    %251 = vmatprep.subr.bf16.mxu0 0
    %252 = vmatpush1.bf16.msra.mxu0 0
    %253 = vmatprep.subr.bf16.mxu0 0
    %254 = vmatpush1.bf16.msra.mxu0 0
    %255 = vmatprep.subr.bf16.mxu0 0
    %256 = vmatpush1.bf16.msra.mxu0 0
    %257 = vmatprep.subr.bf16.mxu0 0
    %258 = vmatpush1.bf16.msra.mxu0 0
    %259 = vmatprep.subr.bf16.mxu0 0
    %260 = vmatpush1.bf16.msra.mxu0 0
    %261 = vmatprep.subr.bf16.mxu0 0
    %262 = vmatpush1.bf16.msra.mxu0 0
    %263 = vmatprep.subr.bf16.mxu0 0
    %264 = vmatpush1.bf16.msra.mxu0 0
    %265 = vmatprep.subr.bf16.mxu0 0
    %266 = vmatpush1.bf16.msra.mxu0 0
    %267 = vmatprep.mubr.bf16.mxu0 0
    %268 = vmatmul.mubr.bf16.gmra.mrb[0].mxu0 %v151
    %v269 = vpop.f32.mrb[0].mxu0
    %v270 = vadd.f32 %v100, %v269
    %v271 = vpop.f32.mrb[0].mxu0
    %v272 = vadd.f32 %v104, %v271
    %v273 = vpop.f32.mrb[0].mxu0
    %v274 = vadd.f32 %v100, %v273
    %v275 = vpop.f32.mrb[0].mxu0
    %v276 = vadd.f32 %v104, %v275
    %277 = vmatprep.mubr.bf16.mxu0 0
    %278 = vmatmul.mubr.bf16.gmra.mrb[0].mxu0 %v154
    %v279 = vpop.f32.mrb[0].mxu0
    %v280 = vadd.f32 %v100, %v279
    %v281 = vpop.f32.mrb[0].mxu0
    %v282 = vadd.f32 %v104, %v281
    %v283 = vpop.f32.mrb[0].mxu0
    %v284 = vadd.f32 %v100, %v283
    %v285 = vpop.f32.mrb[0].mxu0
    %v286 = vadd.f32 %v104, %v285
    %287 = vmatprep.mubr.bf16.mxu0 0
    %288 = vmatmul.mubr.bf16.gmra.mrb[0].mxu0 %v157
    %v289 = vpop.f32.mrb[0].mxu0
    %v290 = vadd.f32 %v100, %v289
    %v291 = vpop.f32.mrb[0].mxu0
    %v292 = vadd.f32 %v104, %v291
    %v293 = vpop.f32.mrb[0].mxu0
    %v294 = vadd.f32 %v100, %v293
    %v295 = vpop.f32.mrb[0].mxu0
    %v296 = vadd.f32 %v104, %v295
    %297 = vmatprep.mubr.bf16.mxu0 0
    %298 = vmatmul.mubr.bf16.gmra.mrb[0].mxu0 %v160
    %v299 = vpop.f32.mrb[0].mxu0
    %v300 = vadd.f32 %v100, %v299
    %v301 = vpop.f32.mrb[0].mxu0
    %v302 = vadd.f32 %v104, %v301
    %v303 = vpop.f32.mrb[0].mxu0
    %v304 = vadd.f32 %v100, %v303
    %v305 = vpop.f32.mrb[0].mxu0
    %v306 = vadd.f32 %v104, %v305
    %307 = vdwg.mxu0
    %308 = vst [vmem:[#allocation2] sm:$0xff] %v197
    %309 = vst [vmem:[#allocation2 + $0x8] sm:$0xff] %v199
    %310 = vst [vmem:[#allocation2 + $0x10] sm:$0xff] %v270
    %311 = vst [vmem:[#allocation2 + $0x18] sm:$0xff] %v272
    %312 = vst [vmem:[#allocation2 + $0x20] sm:$0xff] %v201
    %313 = vst [vmem:[#allocation2 + $0x28] sm:$0xff] %v203
    %314 = vst [vmem:[#allocation2 + $0x30] sm:$0xff] %v274
    %315 = vst [vmem:[#allocation2 + $0x38] sm:$0xff] %v276
    %316 = vst [vmem:[#allocation2 + $0x40] sm:$0xff] %v207
    %317 = vst [vmem:[#allocation2 + $0x48] sm:$0xff] %v209
    %318 = vst [vmem:[#allocation2 + $0x50] sm:$0xff] %v280
    %319 = vst [vmem:[#allocation2 + $0x58] sm:$0xff] %v282
    %320 = vst [vmem:[#allocation2 + $0x60] sm:$0xff] %v211
    %321 = vst [vmem:[#allocation2 + $0x68] sm:$0xff] %v213
    %322 = vst [vmem:[#allocation2 + $0x70] sm:$0xff] %v284
    %323 = vst [vmem:[#allocation2 + $0x78] sm:$0xff] %v286
    %324 = vst [vmem:[#allocation2 + $0x80] sm:$0xff] %v217
    %325 = vst [vmem:[#allocation2 + $0x88] sm:$0xff] %v219
    %326 = vst [vmem:[#allocation2 + $0x90] sm:$0xff] %v290
    %327 = vst [vmem:[#allocation2 + $0x98] sm:$0xff] %v292
    %328 = vst [vmem:[#allocation2 + $0xa0] sm:$0xff] %v221
    %329 = vst [vmem:[#allocation2 + $0xa8] sm:$0xff] %v223
    %330 = vst [vmem:[#allocation2 + $0xb0] sm:$0xff] %v294
    %331 = vst [vmem:[#allocation2 + $0xb8] sm:$0xff] %v296
    %332 = vst [vmem:[#allocation2 + $0xc0] sm:$0xff] %v227
    %333 = vst [vmem:[#allocation2 + $0xc8] sm:$0xff] %v229
    %334 = vst [vmem:[#allocation2 + $0xd0] sm:$0xff] %v300
    %335 = vst [vmem:[#allocation2 + $0xd8] sm:$0xff] %v302
    %336 = vst [vmem:[#allocation2 + $0xe0] sm:$0xff] %v231
    %337 = vst [vmem:[#allocation2 + $0xe8] sm:$0xff] %v233
    %338 = vst [vmem:[#allocation2 + $0xf0] sm:$0xff] %v304
    %339 = vst [vmem:[#allocation2 + $0xf8] sm:$0xff] %v306
    %v340 = vld [vmem:[#allocation8] sm:$0xff]
    %v341 = vld [vmem:[#allocation8 + $0x8] sm:$0xff]
    %v342 = vld [vmem:[#allocation8 + $0x10] sm:$0xff]
    %v343 = vld [vmem:[#allocation8 + $0x18] sm:$0xff]
    %v344 = vld [vmem:[#allocation8 + $0x20] sm:$0xff]
    %v345 = vld [vmem:[#allocation8 + $0x28] sm:$0xff]
    %v346 = vld [vmem:[#allocation8 + $0x30] sm:$0xff]
    %v347 = vld [vmem:[#allocation8 + $0x38] sm:$0xff]
    %v348 = vld [vmem:[#allocation8 + $0x40] sm:$0xff]
    %v349 = vld [vmem:[#allocation8 + $0x48] sm:$0xff]
    %v350 = vld [vmem:[#allocation8 + $0x50] sm:$0xff]
    %v351 = vld [vmem:[#allocation8 + $0x58] sm:$0xff]
    %v352 = vld [vmem:[#allocation8 + $0x60] sm:$0xff]
    %v353 = vld [vmem:[#allocation8 + $0x68] sm:$0xff]
    %v354 = vld [vmem:[#allocation8 + $0x70] sm:$0xff]
    %v355 = vld [vmem:[#allocation8 + $0x78] sm:$0xff]
    %v356 = vld [vmem:[#allocation8 + $0x80] sm:$0xff]
    %v357 = vld [vmem:[#allocation8 + $0x88] sm:$0xff]
    %v358 = vld [vmem:[#allocation8 + $0x90] sm:$0xff]
    %v359 = vld [vmem:[#allocation8 + $0x98] sm:$0xff]
    %v360 = vld [vmem:[#allocation8 + $0xa0] sm:$0xff]
    %v361 = vld [vmem:[#allocation8 + $0xa8] sm:$0xff]
    %v362 = vld [vmem:[#allocation8 + $0xb0] sm:$0xff]
    %v363 = vld [vmem:[#allocation8 + $0xb8] sm:$0xff]
    %v364 = vld [vmem:[#allocation8 + $0xc0] sm:$0xff]
    %v365 = vld [vmem:[#allocation8 + $0xc8] sm:$0xff]
    %v366 = vld [vmem:[#allocation8 + $0xd0] sm:$0xff]
    %v367 = vld [vmem:[#allocation8 + $0xd8] sm:$0xff]
    %v368 = vld [vmem:[#allocation8 + $0xe0] sm:$0xff]
    %v369 = vld [vmem:[#allocation8 + $0xe8] sm:$0xff]
    %v370 = vld [vmem:[#allocation8 + $0xf0] sm:$0xff]
    %v371 = vld [vmem:[#allocation8 + $0xf8] sm:$0xff]
    %s372 = smul.u32 0, 4
    %s373 = smul.addr %s372, 8
    %s374 = scalar_lea.vmem [#allocation2], %s373
    %v375 = vld [vmem:[%s374] sm:$0xff]
    %v376 = vld [vmem:[%s374 + $0x8] sm:$0xff]
    %v377 = vld [vmem:[%s374 + $0x10] sm:$0xff]
    %v378 = vld [vmem:[%s374 + $0x18] sm:$0xff]
    %v411 = vunpack.c.l.b16 %v340
    %v412 = vunpack.c.h.b16 %v340
    %v413 = vunpack.c.l.b16 %v341
    %v414 = vunpack.c.h.b16 %v341
    %v415 = vunpack.c.l.b16 %v342
    %v416 = vunpack.c.h.b16 %v342
    %v417 = vunpack.c.l.b16 %v343
    %v418 = vunpack.c.h.b16 %v343
    %v419 = vunpack.c.l.b16 %v344
    %v420 = vunpack.c.h.b16 %v344
    %v421 = vunpack.c.l.b16 %v345
    %v422 = vunpack.c.h.b16 %v345
    %v423 = vunpack.c.l.b16 %v346
    %v424 = vunpack.c.h.b16 %v346
    %v425 = vunpack.c.l.b16 %v347
    %v426 = vunpack.c.h.b16 %v347
    %v427 = vunpack.c.l.b16 %v348
    %v428 = vunpack.c.h.b16 %v348
    %v429 = vunpack.c.l.b16 %v349
    %v430 = vunpack.c.h.b16 %v349
    %v431 = vunpack.c.l.b16 %v350
    %v432 = vunpack.c.h.b16 %v350
    %v433 = vunpack.c.l.b16 %v351
    %v434 = vunpack.c.h.b16 %v351
    %v435 = vunpack.c.l.b16 %v352
    %v436 = vunpack.c.h.b16 %v352
    %v437 = vunpack.c.l.b16 %v353
    %v438 = vunpack.c.h.b16 %v353
    %v439 = vunpack.c.l.b16 %v354
    %v440 = vunpack.c.h.b16 %v354
    %v441 = vunpack.c.l.b16 %v355
    %v442 = vunpack.c.h.b16 %v355
    %v443 = vunpack.c.l.b16 %v356
    %v444 = vunpack.c.h.b16 %v356
    %v445 = vunpack.c.l.b16 %v357
    %v446 = vunpack.c.h.b16 %v357
    %v447 = vunpack.c.l.b16 %v358
    %v448 = vunpack.c.h.b16 %v358
    %v449 = vunpack.c.l.b16 %v359
    %v450 = vunpack.c.h.b16 %v359
    %v451 = vunpack.c.l.b16 %v360
    %v452 = vunpack.c.h.b16 %v360
    %v453 = vunpack.c.l.b16 %v361
    %v454 = vunpack.c.h.b16 %v361
    %v455 = vunpack.c.l.b16 %v362
    %v456 = vunpack.c.h.b16 %v362
    %v457 = vunpack.c.l.b16 %v363
    %v458 = vunpack.c.h.b16 %v363
    %v459 = vunpack.c.l.b16 %v364
    %v460 = vunpack.c.h.b16 %v364
    %v461 = vunpack.c.l.b16 %v365
    %v462 = vunpack.c.h.b16 %v365
    %v463 = vunpack.c.l.b16 %v366
    %v464 = vunpack.c.h.b16 %v366
    %v465 = vunpack.c.l.b16 %v367
    %v466 = vunpack.c.h.b16 %v367
    %v467 = vunpack.c.l.b16 %v368
    %v468 = vunpack.c.h.b16 %v368
    %v469 = vunpack.c.l.b16 %v369
    %v470 = vunpack.c.h.b16 %v369
    %v471 = vunpack.c.l.b16 %v370
    %v472 = vunpack.c.h.b16 %v370
    %v473 = vunpack.c.l.b16 %v371
    %v474 = vunpack.c.h.b16 %v371
    %v475 = vpack.c.b16 %v415, %v411
    %v476 = vpack.c.b16 %v416, %v412
    %v477 = vpack.c.b16 %v417, %v413
    %v478 = vpack.c.b16 %v418, %v414
    %v479 = vpack.c.b16 %v423, %v419
    %v480 = vpack.c.b16 %v424, %v420
    %v481 = vpack.c.b16 %v425, %v421
    %v482 = vpack.c.b16 %v426, %v422
    %v483 = vpack.c.b16 %v431, %v427
    %v484 = vpack.c.b16 %v432, %v428
    %v485 = vpack.c.b16 %v433, %v429
    %v486 = vpack.c.b16 %v434, %v430
    %v487 = vpack.c.b16 %v439, %v435
    %v488 = vpack.c.b16 %v440, %v436
    %v489 = vpack.c.b16 %v441, %v437
    %v490 = vpack.c.b16 %v442, %v438
    %v491 = vpack.c.b16 %v447, %v443
    %v492 = vpack.c.b16 %v448, %v444
    %v493 = vpack.c.b16 %v449, %v445
    %v494 = vpack.c.b16 %v450, %v446
    %v495 = vpack.c.b16 %v455, %v451
    %v496 = vpack.c.b16 %v456, %v452
    %v497 = vpack.c.b16 %v457, %v453
    %v498 = vpack.c.b16 %v458, %v454
    %v499 = vpack.c.b16 %v463, %v459
    %v500 = vpack.c.b16 %v464, %v460
    %v501 = vpack.c.b16 %v465, %v461
    %v502 = vpack.c.b16 %v466, %v462
    %v503 = vpack.c.b16 %v471, %v467
    %v504 = vpack.c.b16 %v472, %v468
    %v505 = vpack.c.b16 %v473, %v469
    %v506 = vpack.c.b16 %v474, %v470
    %539 = vmatprep.subr.bf16.mxu0 %v476
    %540 = vmatpush1.bf16.msra.mxu0 %v475
    %541 = vmatprep.subr.bf16.mxu0 %v480
    %542 = vmatpush1.bf16.msra.mxu0 %v479
    %543 = vmatprep.subr.bf16.mxu0 %v484
    %544 = vmatpush1.bf16.msra.mxu0 %v483
    %545 = vmatprep.subr.bf16.mxu0 %v488
    %546 = vmatpush1.bf16.msra.mxu0 %v487
    %547 = vmatprep.subr.bf16.mxu0 %v492
    %548 = vmatpush1.bf16.msra.mxu0 %v491
    %549 = vmatprep.subr.bf16.mxu0 %v496
    %550 = vmatpush1.bf16.msra.mxu0 %v495
    %551 = vmatprep.subr.bf16.mxu0 %v500
    %552 = vmatpush1.bf16.msra.mxu0 %v499
    %553 = vmatprep.subr.bf16.mxu0 %v504
    %554 = vmatpush1.bf16.msra.mxu0 %v503
    %555 = vmatprep.subr.bf16.mxu0 0
    %556 = vmatpush1.bf16.msra.mxu0 0
    %557 = vmatprep.subr.bf16.mxu0 0
    %558 = vmatpush1.bf16.msra.mxu0 0
    %559 = vmatprep.subr.bf16.mxu0 0
    %560 = vmatpush1.bf16.msra.mxu0 0
    %561 = vmatprep.subr.bf16.mxu0 0
    %562 = vmatpush1.bf16.msra.mxu0 0
    %563 = vmatprep.subr.bf16.mxu0 0
    %564 = vmatpush1.bf16.msra.mxu0 0
    %565 = vmatprep.subr.bf16.mxu0 0
    %566 = vmatpush1.bf16.msra.mxu0 0
    %567 = vmatprep.subr.bf16.mxu0 0
    %568 = vmatpush1.bf16.msra.mxu0 0
    %569 = vmatprep.subr.bf16.mxu0 0
    %570 = vmatpush1.bf16.msra.mxu0 0
    %571 = vmatprep.mubr.bf16.mxu0 0
    %572 = vmatmul.mubr.bf16.gmra.mrb[0].mxu0 0
    %v573 = vpop.f32.mrb[0].mxu0
    %v574 = vadd.f32 %v375, %v573
    %v575 = vpop.f32.mrb[0].mxu0
    %v576 = vadd.f32 %v376, %v575
    %v577 = vpop.f32.mrb[0].mxu0
    %v578 = vpop.f32.mrb[0].mxu0
    %579 = vdwg.mxu0
    %580 = vmatprep.subr.bf16.mxu0 %v478
    %581 = vmatpush1.bf16.msra.mxu0 %v477
    %582 = vmatprep.subr.bf16.mxu0 %v482
    %583 = vmatpush1.bf16.msra.mxu0 %v481
    %584 = vmatprep.subr.bf16.mxu0 %v486
    %585 = vmatpush1.bf16.msra.mxu0 %v485
    %586 = vmatprep.subr.bf16.mxu0 %v490
    %587 = vmatpush1.bf16.msra.mxu0 %v489
    %588 = vmatprep.subr.bf16.mxu0 %v494
    %589 = vmatpush1.bf16.msra.mxu0 %v493
    %590 = vmatprep.subr.bf16.mxu0 %v498
    %591 = vmatpush1.bf16.msra.mxu0 %v497
    %592 = vmatprep.subr.bf16.mxu0 %v502
    %593 = vmatpush1.bf16.msra.mxu0 %v501
    %594 = vmatprep.subr.bf16.mxu0 %v506
    %595 = vmatpush1.bf16.msra.mxu0 %v505
    %596 = vmatprep.subr.bf16.mxu0 0
    %597 = vmatpush1.bf16.msra.mxu0 0
    %598 = vmatprep.subr.bf16.mxu0 0
    %599 = vmatpush1.bf16.msra.mxu0 0
    %600 = vmatprep.subr.bf16.mxu0 0
    %601 = vmatpush1.bf16.msra.mxu0 0
    %602 = vmatprep.subr.bf16.mxu0 0
    %603 = vmatpush1.bf16.msra.mxu0 0
    %604 = vmatprep.subr.bf16.mxu0 0
    %605 = vmatpush1.bf16.msra.mxu0 0
    %606 = vmatprep.subr.bf16.mxu0 0
    %607 = vmatpush1.bf16.msra.mxu0 0
    %608 = vmatprep.subr.bf16.mxu0 0
    %609 = vmatpush1.bf16.msra.mxu0 0
    %610 = vmatprep.subr.bf16.mxu0 0
    %611 = vmatpush1.bf16.msra.mxu0 0
    %612 = vmatprep.mubr.bf16.mxu0 0
    %613 = vmatmul.mubr.bf16.gmra.mrb[0].mxu0 0
    %v614 = vpop.f32.mrb[0].mxu0
    %v615 = vadd.f32 %v377, %v614
    %v616 = vpop.f32.mrb[0].mxu0
    %v617 = vadd.f32 %v378, %v616
    %v618 = vpop.f32.mrb[0].mxu0
    %v619 = vpop.f32.mrb[0].mxu0
    %620 = vdwg.mxu0
    %v621 = vxor.u32 %v574, 2147483648
    %v622 = vmul.f32 %v621, 1.442695
    %v623 = vpow.pop %v622
    %v624 = vadd.f32 %v623, 1.0
    %v625 = vrcp.pop %v624
    %v626 = vmul.f32 1.0, %v625
    %v627 = vxor.u32 %v576, 2147483648
    %v628 = vmul.f32 %v627, 1.442695
    %v629 = vpow.pop %v628
    %v630 = vadd.f32 %v629, 1.0
    %v631 = vrcp.pop %v630
    %v632 = vmul.f32 1.0, %v631
    %v633 = vtanh.pop %v615
    %v634 = vxor.u32 %v617, 2147483648
    %v635 = vmul.f32 %v634, 1.442695
    %v636 = vpow.pop %v635
    %v637 = vadd.f32 %v636, 1.0
    %v638 = vrcp.pop %v637
    %v639 = vmul.f32 1.0, %v638
    %v640 = vmul.f32 %v632, 0.0
    %v641 = vmul.f32 %v626, %v633
    %v642 = vadd.f32 %v640, %v641
    %v643 = vtanh.pop %v642
    %v644 = vmul.f32 %v639, %v643
    %v645 = vpack.c.bf16 %v644, %v644
    %s646 = smul.u32 1, 4
    %s647 = smul.addr %s646, 8
    %s648 = scalar_lea.vmem [#allocation2], %s647
    %v649 = vld [vmem:[%s648] sm:$0xff]
    %v650 = vld [vmem:[%s648 + $0x8] sm:$0xff]
    %v651 = vld [vmem:[%s648 + $0x10] sm:$0xff]
    %v652 = vld [vmem:[%s648 + $0x18] sm:$0xff]
    %653 = vmatprep.subr.bf16.mxu0 %v476
    %654 = vmatpush1.bf16.msra.mxu0 %v475
    %655 = vmatprep.subr.bf16.mxu0 %v480
    %656 = vmatpush1.bf16.msra.mxu0 %v479
    %657 = vmatprep.subr.bf16.mxu0 %v484
    %658 = vmatpush1.bf16.msra.mxu0 %v483
    %659 = vmatprep.subr.bf16.mxu0 %v488
    %660 = vmatpush1.bf16.msra.mxu0 %v487
    %661 = vmatprep.subr.bf16.mxu0 %v492
    %662 = vmatpush1.bf16.msra.mxu0 %v491
    %663 = vmatprep.subr.bf16.mxu0 %v496
    %664 = vmatpush1.bf16.msra.mxu0 %v495
    %665 = vmatprep.subr.bf16.mxu0 %v500
    %666 = vmatpush1.bf16.msra.mxu0 %v499
    %667 = vmatprep.subr.bf16.mxu0 %v504
    %668 = vmatpush1.bf16.msra.mxu0 %v503
    %669 = vmatprep.subr.bf16.mxu0 0
    %670 = vmatpush1.bf16.msra.mxu0 0
    %671 = vmatprep.subr.bf16.mxu0 0
    %672 = vmatpush1.bf16.msra.mxu0 0
    %673 = vmatprep.subr.bf16.mxu0 0
    %674 = vmatpush1.bf16.msra.mxu0 0
    %675 = vmatprep.subr.bf16.mxu0 0
    %676 = vmatpush1.bf16.msra.mxu0 0
    %677 = vmatprep.subr.bf16.mxu0 0
    %678 = vmatpush1.bf16.msra.mxu0 0
    %679 = vmatprep.subr.bf16.mxu0 0
    %680 = vmatpush1.bf16.msra.mxu0 0
    %681 = vmatprep.subr.bf16.mxu0 0
    %682 = vmatpush1.bf16.msra.mxu0 0
    %683 = vmatprep.subr.bf16.mxu0 0
    %684 = vmatpush1.bf16.msra.mxu0 0
    %685 = vmatprep.mubr.bf16.mxu0 0
    %686 = vmatmul.mubr.bf16.gmra.mrb[0].mxu0 %v645
    %v687 = vpop.f32.mrb[0].mxu0
    %v688 = vadd.f32 %v649, %v687
    %v689 = vpop.f32.mrb[0].mxu0
    %v690 = vadd.f32 %v650, %v689
    %v691 = vpop.f32.mrb[0].mxu0
    %v692 = vpop.f32.mrb[0].mxu0
    %693 = vdwg.mxu0
    %694 = vmatprep.subr.bf16.mxu0 %v478
    %695 = vmatpush1.bf16.msra.mxu0 %v477
    %696 = vmatprep.subr.bf16.mxu0 %v482
    %697 = vmatpush1.bf16.msra.mxu0 %v481
    %698 = vmatprep.subr.bf16.mxu0 %v486
    %699 = vmatpush1.bf16.msra.mxu0 %v485
    %700 = vmatprep.subr.bf16.mxu0 %v490
    %701 = vmatpush1.bf16.msra.mxu0 %v489
    %702 = vmatprep.subr.bf16.mxu0 %v494
    %703 = vmatpush1.bf16.msra.mxu0 %v493
    %704 = vmatprep.subr.bf16.mxu0 %v498
    %705 = vmatpush1.bf16.msra.mxu0 %v497
    %706 = vmatprep.subr.bf16.mxu0 %v502
    %707 = vmatpush1.bf16.msra.mxu0 %v501
    %708 = vmatprep.subr.bf16.mxu0 %v506
    %709 = vmatpush1.bf16.msra.mxu0 %v505
    %710 = vmatprep.subr.bf16.mxu0 0
    %711 = vmatpush1.bf16.msra.mxu0 0
    %712 = vmatprep.subr.bf16.mxu0 0
    %713 = vmatpush1.bf16.msra.mxu0 0
    %714 = vmatprep.subr.bf16.mxu0 0
    %715 = vmatpush1.bf16.msra.mxu0 0
    %716 = vmatprep.subr.bf16.mxu0 0
    %717 = vmatpush1.bf16.msra.mxu0 0
    %718 = vmatprep.subr.bf16.mxu0 0
    %719 = vmatpush1.bf16.msra.mxu0 0
    %720 = vmatprep.subr.bf16.mxu0 0
    %721 = vmatpush1.bf16.msra.mxu0 0
    %722 = vmatprep.subr.bf16.mxu0 0
    %723 = vmatpush1.bf16.msra.mxu0 0
    %724 = vmatprep.subr.bf16.mxu0 0
    %725 = vmatpush1.bf16.msra.mxu0 0
    %726 = vmatprep.mubr.bf16.mxu0 0
    %727 = vmatmul.mubr.bf16.gmra.mrb[0].mxu0 %v645
    %v728 = vpop.f32.mrb[0].mxu0
    %v729 = vadd.f32 %v651, %v728
    %v730 = vpop.f32.mrb[0].mxu0
    %v731 = vadd.f32 %v652, %v730
    %v732 = vpop.f32.mrb[0].mxu0
    %v733 = vpop.f32.mrb[0].mxu0
    %734 = vdwg.mxu0
    %v735 = vxor.u32 %v688, 2147483648
    %v736 = vmul.f32 %v735, 1.442695
    %v737 = vpow.pop %v736
    %v738 = vadd.f32 %v737, 1.0
    %v739 = vrcp.pop %v738
    %v740 = vmul.f32 1.0, %v739
    %v741 = vxor.u32 %v690, 2147483648
    %v742 = vmul.f32 %v741, 1.442695
    %v743 = vpow.pop %v742
    %v744 = vadd.f32 %v743, 1.0
    %v745 = vrcp.pop %v744
    %v746 = vmul.f32 1.0, %v745
    %v747 = vtanh.pop %v729
    %v748 = vxor.u32 %v731, 2147483648
    %v749 = vmul.f32 %v748, 1.442695
    %v750 = vpow.pop %v749
    %v751 = vadd.f32 %v750, 1.0
    %v752 = vrcp.pop %v751
    %v753 = vmul.f32 1.0, %v752
    %v754 = vmul.f32 %v746, %v642
    %v755 = vmul.f32 %v740, %v747
    %v756 = vadd.f32 %v754, %v755
    %v757 = vtanh.pop %v756
    %v758 = vmul.f32 %v753, %v757
    %v759 = vpack.c.bf16 %v758, %v758
    %s760 = smul.u32 2, 4
    %s761 = smul.addr %s760, 8
    %s762 = scalar_lea.vmem [#allocation2], %s761
    %v763 = vld [vmem:[%s762] sm:$0xff]
    %v764 = vld [vmem:[%s762 + $0x8] sm:$0xff]
    %v765 = vld [vmem:[%s762 + $0x10] sm:$0xff]
    %v766 = vld [vmem:[%s762 + $0x18] sm:$0xff]
    %767 = vmatprep.subr.bf16.mxu0 %v476
    %768 = vmatpush1.bf16.msra.mxu0 %v475
    %769 = vmatprep.subr.bf16.mxu0 %v480
    %770 = vmatpush1.bf16.msra.mxu0 %v479
    %771 = vmatprep.subr.bf16.mxu0 %v484
    %772 = vmatpush1.bf16.msra.mxu0 %v483
    %773 = vmatprep.subr.bf16.mxu0 %v488
    %774 = vmatpush1.bf16.msra.mxu0 %v487
    %775 = vmatprep.subr.bf16.mxu0 %v492
    %776 = vmatpush1.bf16.msra.mxu0 %v491
    %777 = vmatprep.subr.bf16.mxu0 %v496
    %778 = vmatpush1.bf16.msra.mxu0 %v495
    %779 = vmatprep.subr.bf16.mxu0 %v500
    %780 = vmatpush1.bf16.msra.mxu0 %v499
    %781 = vmatprep.subr.bf16.mxu0 %v504
    %782 = vmatpush1.bf16.msra.mxu0 %v503
    %783 = vmatprep.subr.bf16.mxu0 0
    %784 = vmatpush1.bf16.msra.mxu0 0
    %785 = vmatprep.subr.bf16.mxu0 0
    %786 = vmatpush1.bf16.msra.mxu0 0
    %787 = vmatprep.subr.bf16.mxu0 0
    %788 = vmatpush1.bf16.msra.mxu0 0
    %789 = vmatprep.subr.bf16.mxu0 0
    %790 = vmatpush1.bf16.msra.mxu0 0
    %791 = vmatprep.subr.bf16.mxu0 0
    %792 = vmatpush1.bf16.msra.mxu0 0
    %793 = vmatprep.subr.bf16.mxu0 0
    %794 = vmatpush1.bf16.msra.mxu0 0
    %795 = vmatprep.subr.bf16.mxu0 0
    %796 = vmatpush1.bf16.msra.mxu0 0
    %797 = vmatprep.subr.bf16.mxu0 0
    %798 = vmatpush1.bf16.msra.mxu0 0
    %799 = vmatprep.mubr.bf16.mxu0 0
    %800 = vmatmul.mubr.bf16.gmra.mrb[0].mxu0 %v759
    %v801 = vpop.f32.mrb[0].mxu0
    %v802 = vadd.f32 %v763, %v801
    %v803 = vpop.f32.mrb[0].mxu0
    %v804 = vadd.f32 %v764, %v803
    %v805 = vpop.f32.mrb[0].mxu0
    %v806 = vpop.f32.mrb[0].mxu0
    %807 = vdwg.mxu0
    %808 = vmatprep.subr.bf16.mxu0 %v478
    %809 = vmatpush1.bf16.msra.mxu0 %v477
    %810 = vmatprep.subr.bf16.mxu0 %v482
    %811 = vmatpush1.bf16.msra.mxu0 %v481
    %812 = vmatprep.subr.bf16.mxu0 %v486
    %813 = vmatpush1.bf16.msra.mxu0 %v485
    %814 = vmatprep.subr.bf16.mxu0 %v490
    %815 = vmatpush1.bf16.msra.mxu0 %v489
    %816 = vmatprep.subr.bf16.mxu0 %v494
    %817 = vmatpush1.bf16.msra.mxu0 %v493
    %818 = vmatprep.subr.bf16.mxu0 %v498
    %819 = vmatpush1.bf16.msra.mxu0 %v497
    %820 = vmatprep.subr.bf16.mxu0 %v502
    %821 = vmatpush1.bf16.msra.mxu0 %v501
    %822 = vmatprep.subr.bf16.mxu0 %v506
    %823 = vmatpush1.bf16.msra.mxu0 %v505
    %824 = vmatprep.subr.bf16.mxu0 0
    %825 = vmatpush1.bf16.msra.mxu0 0
    %826 = vmatprep.subr.bf16.mxu0 0
    %827 = vmatpush1.bf16.msra.mxu0 0
    %828 = vmatprep.subr.bf16.mxu0 0
    %829 = vmatpush1.bf16.msra.mxu0 0
    %830 = vmatprep.subr.bf16.mxu0 0
    %831 = vmatpush1.bf16.msra.mxu0 0
    %832 = vmatprep.subr.bf16.mxu0 0
    %833 = vmatpush1.bf16.msra.mxu0 0
    %834 = vmatprep.subr.bf16.mxu0 0
    %835 = vmatpush1.bf16.msra.mxu0 0
    %836 = vmatprep.subr.bf16.mxu0 0
    %837 = vmatpush1.bf16.msra.mxu0 0
    %838 = vmatprep.subr.bf16.mxu0 0
    %839 = vmatpush1.bf16.msra.mxu0 0
    %840 = vmatprep.mubr.bf16.mxu0 0
    %841 = vmatmul.mubr.bf16.gmra.mrb[0].mxu0 %v759
    %v842 = vpop.f32.mrb[0].mxu0
    %v843 = vadd.f32 %v765, %v842
    %v844 = vpop.f32.mrb[0].mxu0
    %v845 = vadd.f32 %v766, %v844
    %v846 = vpop.f32.mrb[0].mxu0
    %v847 = vpop.f32.mrb[0].mxu0
    %848 = vdwg.mxu0
    %v849 = vxor.u32 %v802, 2147483648
    %v850 = vmul.f32 %v849, 1.442695
    %v851 = vpow.pop %v850
    %v852 = vadd.f32 %v851, 1.0
    %v853 = vrcp.pop %v852
    %v854 = vmul.f32 1.0, %v853
    %v855 = vxor.u32 %v804, 2147483648
    %v856 = vmul.f32 %v855, 1.442695
    %v857 = vpow.pop %v856
    %v858 = vadd.f32 %v857, 1.0
    %v859 = vrcp.pop %v858
    %v860 = vmul.f32 1.0, %v859
    %v861 = vtanh.pop %v843
    %v862 = vxor.u32 %v845, 2147483648
    %v863 = vmul.f32 %v862, 1.442695
    %v864 = vpow.pop %v863
    %v865 = vadd.f32 %v864, 1.0
    %v866 = vrcp.pop %v865
    %v867 = vmul.f32 1.0, %v866
    %v868 = vmul.f32 %v860, %v756
    %v869 = vmul.f32 %v854, %v861
    %v870 = vadd.f32 %v868, %v869
    %v871 = vtanh.pop %v870
    %v872 = vmul.f32 %v867, %v871
    %v873 = vpack.c.bf16 %v872, %v872
    %s874 = smul.u32 3, 4
    %s875 = smul.addr %s874, 8
    %s876 = scalar_lea.vmem [#allocation2], %s875
    %v877 = vld [vmem:[%s876] sm:$0xff]
    %v878 = vld [vmem:[%s876 + $0x8] sm:$0xff]
    %v879 = vld [vmem:[%s876 + $0x10] sm:$0xff]
    %v880 = vld [vmem:[%s876 + $0x18] sm:$0xff]
    %881 = vmatprep.subr.bf16.mxu0 %v476
    %882 = vmatpush1.bf16.msra.mxu0 %v475
    %883 = vmatprep.subr.bf16.mxu0 %v480
    %884 = vmatpush1.bf16.msra.mxu0 %v479
    %885 = vmatprep.subr.bf16.mxu0 %v484
    %886 = vmatpush1.bf16.msra.mxu0 %v483
    %887 = vmatprep.subr.bf16.mxu0 %v488
    %888 = vmatpush1.bf16.msra.mxu0 %v487
    %889 = vmatprep.subr.bf16.mxu0 %v492
    %890 = vmatpush1.bf16.msra.mxu0 %v491
    %891 = vmatprep.subr.bf16.mxu0 %v496
    %892 = vmatpush1.bf16.msra.mxu0 %v495
    %893 = vmatprep.subr.bf16.mxu0 %v500
    %894 = vmatpush1.bf16.msra.mxu0 %v499
    %895 = vmatprep.subr.bf16.mxu0 %v504
    %896 = vmatpush1.bf16.msra.mxu0 %v503
    %897 = vmatprep.subr.bf16.mxu0 0
    %898 = vmatpush1.bf16.msra.mxu0 0
    %899 = vmatprep.subr.bf16.mxu0 0
    %900 = vmatpush1.bf16.msra.mxu0 0
    %901 = vmatprep.subr.bf16.mxu0 0
    %902 = vmatpush1.bf16.msra.mxu0 0
    %903 = vmatprep.subr.bf16.mxu0 0
    %904 = vmatpush1.bf16.msra.mxu0 0
    %905 = vmatprep.subr.bf16.mxu0 0
    %906 = vmatpush1.bf16.msra.mxu0 0
    %907 = vmatprep.subr.bf16.mxu0 0
    %908 = vmatpush1.bf16.msra.mxu0 0
    %909 = vmatprep.subr.bf16.mxu0 0
    %910 = vmatpush1.bf16.msra.mxu0 0
    %911 = vmatprep.subr.bf16.mxu0 0
    %912 = vmatpush1.bf16.msra.mxu0 0
    %913 = vmatprep.mubr.bf16.mxu0 0
    %914 = vmatmul.mubr.bf16.gmra.mrb[0].mxu0 %v873
    %v915 = vpop.f32.mrb[0].mxu0
    %v916 = vadd.f32 %v877, %v915
    %v917 = vpop.f32.mrb[0].mxu0
    %v918 = vadd.f32 %v878, %v917
    %v919 = vpop.f32.mrb[0].mxu0
    %v920 = vpop.f32.mrb[0].mxu0
    %921 = vdwg.mxu0
    %922 = vmatprep.subr.bf16.mxu0 %v478
    %923 = vmatpush1.bf16.msra.mxu0 %v477
    %924 = vmatprep.subr.bf16.mxu0 %v482
    %925 = vmatpush1.bf16.msra.mxu0 %v481
    %926 = vmatprep.subr.bf16.mxu0 %v486
    %927 = vmatpush1.bf16.msra.mxu0 %v485
    %928 = vmatprep.subr.bf16.mxu0 %v490
    %929 = vmatpush1.bf16.msra.mxu0 %v489
    %930 = vmatprep.subr.bf16.mxu0 %v494
    %931 = vmatpush1.bf16.msra.mxu0 %v493
    %932 = vmatprep.subr.bf16.mxu0 %v498
    %933 = vmatpush1.bf16.msra.mxu0 %v497
    %934 = vmatprep.subr.bf16.mxu0 %v502
    %935 = vmatpush1.bf16.msra.mxu0 %v501
    %936 = vmatprep.subr.bf16.mxu0 %v506
    %937 = vmatpush1.bf16.msra.mxu0 %v505
    %938 = vmatprep.subr.bf16.mxu0 0
    %939 = vmatpush1.bf16.msra.mxu0 0
    %940 = vmatprep.subr.bf16.mxu0 0
    %941 = vmatpush1.bf16.msra.mxu0 0
    %942 = vmatprep.subr.bf16.mxu0 0
    %943 = vmatpush1.bf16.msra.mxu0 0
    %944 = vmatprep.subr.bf16.mxu0 0
    %945 = vmatpush1.bf16.msra.mxu0 0
    %946 = vmatprep.subr.bf16.mxu0 0
    %947 = vmatpush1.bf16.msra.mxu0 0
    %948 = vmatprep.subr.bf16.mxu0 0
    %949 = vmatpush1.bf16.msra.mxu0 0
    %950 = vmatprep.subr.bf16.mxu0 0
    %951 = vmatpush1.bf16.msra.mxu0 0
    %952 = vmatprep.subr.bf16.mxu0 0
    %953 = vmatpush1.bf16.msra.mxu0 0
    %954 = vmatprep.mubr.bf16.mxu0 0
    %955 = vmatmul.mubr.bf16.gmra.mrb[0].mxu0 %v873
    %v956 = vpop.f32.mrb[0].mxu0
    %v957 = vadd.f32 %v879, %v956
    %v958 = vpop.f32.mrb[0].mxu0
    %v959 = vadd.f32 %v880, %v958
    %v960 = vpop.f32.mrb[0].mxu0
    %v961 = vpop.f32.mrb[0].mxu0
    %962 = vdwg.mxu0
    %v963 = vxor.u32 %v916, 2147483648
    %v964 = vmul.f32 %v963, 1.442695
    %v965 = vpow.pop %v964
    %v966 = vadd.f32 %v965, 1.0
    %v967 = vrcp.pop %v966
    %v968 = vmul.f32 1.0, %v967
    %v969 = vxor.u32 %v918, 2147483648
    %v970 = vmul.f32 %v969, 1.442695
    %v971 = vpow.pop %v970
    %v972 = vadd.f32 %v971, 1.0
    %v973 = vrcp.pop %v972
    %v974 = vmul.f32 1.0, %v973
    %v975 = vtanh.pop %v957
    %v976 = vxor.u32 %v959, 2147483648
    %v977 = vmul.f32 %v976, 1.442695
    %v978 = vpow.pop %v977
    %v979 = vadd.f32 %v978, 1.0
    %v980 = vrcp.pop %v979
    %v981 = vmul.f32 1.0, %v980
    %v982 = vmul.f32 %v974, %v870
    %v983 = vmul.f32 %v968, %v975
    %v984 = vadd.f32 %v982, %v983
    %v985 = vtanh.pop %v984
    %v986 = vmul.f32 %v981, %v985
    %v987 = vpack.c.bf16 %v986, %v986
    %s988 = smul.u32 4, 4
    %s989 = smul.addr %s988, 8
    %s990 = scalar_lea.vmem [#allocation2], %s989
    %v991 = vld [vmem:[%s990] sm:$0xff]
    %v992 = vld [vmem:[%s990 + $0x8] sm:$0xff]
    %v993 = vld [vmem:[%s990 + $0x10] sm:$0xff]
    %v994 = vld [vmem:[%s990 + $0x18] sm:$0xff]
    %995 = vmatprep.subr.bf16.mxu0 %v476
    %996 = vmatpush1.bf16.msra.mxu0 %v475
    %997 = vmatprep.subr.bf16.mxu0 %v480
    %998 = vmatpush1.bf16.msra.mxu0 %v479
    %999 = vmatprep.subr.bf16.mxu0 %v484
    %1000 = vmatpush1.bf16.msra.mxu0 %v483
    %1001 = vmatprep.subr.bf16.mxu0 %v488
    %1002 = vmatpush1.bf16.msra.mxu0 %v487
    %1003 = vmatprep.subr.bf16.mxu0 %v492
    %1004 = vmatpush1.bf16.msra.mxu0 %v491
    %1005 = vmatprep.subr.bf16.mxu0 %v496
    %1006 = vmatpush1.bf16.msra.mxu0 %v495
    %1007 = vmatprep.subr.bf16.mxu0 %v500
    %1008 = vmatpush1.bf16.msra.mxu0 %v499
    %1009 = vmatprep.subr.bf16.mxu0 %v504
    %1010 = vmatpush1.bf16.msra.mxu0 %v503
    %1011 = vmatprep.subr.bf16.mxu0 0
    %1012 = vmatpush1.bf16.msra.mxu0 0
    %1013 = vmatprep.subr.bf16.mxu0 0
    %1014 = vmatpush1.bf16.msra.mxu0 0
    %1015 = vmatprep.subr.bf16.mxu0 0
    %1016 = vmatpush1.bf16.msra.mxu0 0
    %1017 = vmatprep.subr.bf16.mxu0 0
    %1018 = vmatpush1.bf16.msra.mxu0 0
    %1019 = vmatprep.subr.bf16.mxu0 0
    %1020 = vmatpush1.bf16.msra.mxu0 0
    %1021 = vmatprep.subr.bf16.mxu0 0
    %1022 = vmatpush1.bf16.msra.mxu0 0
    %1023 = vmatprep.subr.bf16.mxu0 0
    %1024 = vmatpush1.bf16.msra.mxu0 0
    %1025 = vmatprep.subr.bf16.mxu0 0
    %1026 = vmatpush1.bf16.msra.mxu0 0
    %1027 = vmatprep.mubr.bf16.mxu0 0
    %1028 = vmatmul.mubr.bf16.gmra.mrb[0].mxu0 %v987
    %v1029 = vpop.f32.mrb[0].mxu0
    %v1030 = vadd.f32 %v991, %v1029
    %v1031 = vpop.f32.mrb[0].mxu0
    %v1032 = vadd.f32 %v992, %v1031
    %v1033 = vpop.f32.mrb[0].mxu0
    %v1034 = vpop.f32.mrb[0].mxu0
    %1035 = vdwg.mxu0
    %1036 = vmatprep.subr.bf16.mxu0 %v478
    %1037 = vmatpush1.bf16.msra.mxu0 %v477
    %1038 = vmatprep.subr.bf16.mxu0 %v482
    %1039 = vmatpush1.bf16.msra.mxu0 %v481
    %1040 = vmatprep.subr.bf16.mxu0 %v486
    %1041 = vmatpush1.bf16.msra.mxu0 %v485
    %1042 = vmatprep.subr.bf16.mxu0 %v490
    %1043 = vmatpush1.bf16.msra.mxu0 %v489
    %1044 = vmatprep.subr.bf16.mxu0 %v494
    %1045 = vmatpush1.bf16.msra.mxu0 %v493
    %1046 = vmatprep.subr.bf16.mxu0 %v498
    %1047 = vmatpush1.bf16.msra.mxu0 %v497
    %1048 = vmatprep.subr.bf16.mxu0 %v502
    %1049 = vmatpush1.bf16.msra.mxu0 %v501
    %1050 = vmatprep.subr.bf16.mxu0 %v506
    %1051 = vmatpush1.bf16.msra.mxu0 %v505
    %1052 = vmatprep.subr.bf16.mxu0 0
    %1053 = vmatpush1.bf16.msra.mxu0 0
    %1054 = vmatprep.subr.bf16.mxu0 0
    %1055 = vmatpush1.bf16.msra.mxu0 0
    %1056 = vmatprep.subr.bf16.mxu0 0
    %1057 = vmatpush1.bf16.msra.mxu0 0
    %1058 = vmatprep.subr.bf16.mxu0 0
    %1059 = vmatpush1.bf16.msra.mxu0 0
    %1060 = vmatprep.subr.bf16.mxu0 0
    %1061 = vmatpush1.bf16.msra.mxu0 0
    %1062 = vmatprep.subr.bf16.mxu0 0
    %1063 = vmatpush1.bf16.msra.mxu0 0
    %1064 = vmatprep.subr.bf16.mxu0 0
    %1065 = vmatpush1.bf16.msra.mxu0 0
    %1066 = vmatprep.subr.bf16.mxu0 0
    %1067 = vmatpush1.bf16.msra.mxu0 0
    %1068 = vmatprep.mubr.bf16.mxu0 0
    %1069 = vmatmul.mubr.bf16.gmra.mrb[0].mxu0 %v987
    %v1070 = vpop.f32.mrb[0].mxu0
    %v1071 = vadd.f32 %v993, %v1070
    %v1072 = vpop.f32.mrb[0].mxu0
    %v1073 = vadd.f32 %v994, %v1072
    %v1074 = vpop.f32.mrb[0].mxu0
    %v1075 = vpop.f32.mrb[0].mxu0
    %1076 = vdwg.mxu0
    %v1077 = vxor.u32 %v1030, 2147483648
    %v1078 = vmul.f32 %v1077, 1.442695
    %v1079 = vpow.pop %v1078
    %v1080 = vadd.f32 %v1079, 1.0
    %v1081 = vrcp.pop %v1080
    %v1082 = vmul.f32 1.0, %v1081
    %v1083 = vxor.u32 %v1032, 2147483648
    %v1084 = vmul.f32 %v1083, 1.442695
    %v1085 = vpow.pop %v1084
    %v1086 = vadd.f32 %v1085, 1.0
    %v1087 = vrcp.pop %v1086
    %v1088 = vmul.f32 1.0, %v1087
    %v1089 = vtanh.pop %v1071
    %v1090 = vxor.u32 %v1073, 2147483648
    %v1091 = vmul.f32 %v1090, 1.442695
    %v1092 = vpow.pop %v1091
    %v1093 = vadd.f32 %v1092, 1.0
    %v1094 = vrcp.pop %v1093
    %v1095 = vmul.f32 1.0, %v1094
    %v1096 = vmul.f32 %v1088, %v984
    %v1097 = vmul.f32 %v1082, %v1089
    %v1098 = vadd.f32 %v1096, %v1097
    %v1099 = vtanh.pop %v1098
    %v1100 = vmul.f32 %v1095, %v1099
    %v1101 = vpack.c.bf16 %v1100, %v1100
    %s1102 = smul.u32 5, 4
    %s1103 = smul.addr %s1102, 8
    %s1104 = scalar_lea.vmem [#allocation2], %s1103
    %v1105 = vld [vmem:[%s1104] sm:$0xff]
    %v1106 = vld [vmem:[%s1104 + $0x8] sm:$0xff]
    %v1107 = vld [vmem:[%s1104 + $0x10] sm:$0xff]
    %v1108 = vld [vmem:[%s1104 + $0x18] sm:$0xff]
    %1109 = vmatprep.subr.bf16.mxu0 %v476
    %1110 = vmatpush1.bf16.msra.mxu0 %v475
    %1111 = vmatprep.subr.bf16.mxu0 %v480
    %1112 = vmatpush1.bf16.msra.mxu0 %v479
    %1113 = vmatprep.subr.bf16.mxu0 %v484
    %1114 = vmatpush1.bf16.msra.mxu0 %v483
    %1115 = vmatprep.subr.bf16.mxu0 %v488
    %1116 = vmatpush1.bf16.msra.mxu0 %v487
    %1117 = vmatprep.subr.bf16.mxu0 %v492
    %1118 = vmatpush1.bf16.msra.mxu0 %v491
    %1119 = vmatprep.subr.bf16.mxu0 %v496
    %1120 = vmatpush1.bf16.msra.mxu0 %v495
    %1121 = vmatprep.subr.bf16.mxu0 %v500
    %1122 = vmatpush1.bf16.msra.mxu0 %v499
    %1123 = vmatprep.subr.bf16.mxu0 %v504
    %1124 = vmatpush1.bf16.msra.mxu0 %v503
    %1125 = vmatprep.subr.bf16.mxu0 0
    %1126 = vmatpush1.bf16.msra.mxu0 0
    %1127 = vmatprep.subr.bf16.mxu0 0
    %1128 = vmatpush1.bf16.msra.mxu0 0
    %1129 = vmatprep.subr.bf16.mxu0 0
    %1130 = vmatpush1.bf16.msra.mxu0 0
    %1131 = vmatprep.subr.bf16.mxu0 0
    %1132 = vmatpush1.bf16.msra.mxu0 0
    %1133 = vmatprep.subr.bf16.mxu0 0
    %1134 = vmatpush1.bf16.msra.mxu0 0
    %1135 = vmatprep.subr.bf16.mxu0 0
    %1136 = vmatpush1.bf16.msra.mxu0 0
    %1137 = vmatprep.subr.bf16.mxu0 0
    %1138 = vmatpush1.bf16.msra.mxu0 0
    %1139 = vmatprep.subr.bf16.mxu0 0
    %1140 = vmatpush1.bf16.msra.mxu0 0
    %1141 = vmatprep.mubr.bf16.mxu0 0
    %1142 = vmatmul.mubr.bf16.gmra.mrb[0].mxu0 %v1101
    %v1143 = vpop.f32.mrb[0].mxu0
    %v1144 = vadd.f32 %v1105, %v1143
    %v1145 = vpop.f32.mrb[0].mxu0
    %v1146 = vadd.f32 %v1106, %v1145
    %v1147 = vpop.f32.mrb[0].mxu0
    %v1148 = vpop.f32.mrb[0].mxu0
    %1149 = vdwg.mxu0
    %1150 = vmatprep.subr.bf16.mxu0 %v478
    %1151 = vmatpush1.bf16.msra.mxu0 %v477
    %1152 = vmatprep.subr.bf16.mxu0 %v482
    %1153 = vmatpush1.bf16.msra.mxu0 %v481
    %1154 = vmatprep.subr.bf16.mxu0 %v486
    %1155 = vmatpush1.bf16.msra.mxu0 %v485
    %1156 = vmatprep.subr.bf16.mxu0 %v490
    %1157 = vmatpush1.bf16.msra.mxu0 %v489
    %1158 = vmatprep.subr.bf16.mxu0 %v494
    %1159 = vmatpush1.bf16.msra.mxu0 %v493
    %1160 = vmatprep.subr.bf16.mxu0 %v498
    %1161 = vmatpush1.bf16.msra.mxu0 %v497
    %1162 = vmatprep.subr.bf16.mxu0 %v502
    %1163 = vmatpush1.bf16.msra.mxu0 %v501
    %1164 = vmatprep.subr.bf16.mxu0 %v506
    %1165 = vmatpush1.bf16.msra.mxu0 %v505
    %1166 = vmatprep.subr.bf16.mxu0 0
    %1167 = vmatpush1.bf16.msra.mxu0 0
    %1168 = vmatprep.subr.bf16.mxu0 0
    %1169 = vmatpush1.bf16.msra.mxu0 0
    %1170 = vmatprep.subr.bf16.mxu0 0
    %1171 = vmatpush1.bf16.msra.mxu0 0
    %1172 = vmatprep.subr.bf16.mxu0 0
    %1173 = vmatpush1.bf16.msra.mxu0 0
    %1174 = vmatprep.subr.bf16.mxu0 0
    %1175 = vmatpush1.bf16.msra.mxu0 0
    %1176 = vmatprep.subr.bf16.mxu0 0
    %1177 = vmatpush1.bf16.msra.mxu0 0
    %1178 = vmatprep.subr.bf16.mxu0 0
    %1179 = vmatpush1.bf16.msra.mxu0 0
    %1180 = vmatprep.subr.bf16.mxu0 0
    %1181 = vmatpush1.bf16.msra.mxu0 0
    %1182 = vmatprep.mubr.bf16.mxu0 0
    %1183 = vmatmul.mubr.bf16.gmra.mrb[0].mxu0 %v1101
    %v1184 = vpop.f32.mrb[0].mxu0
    %v1185 = vadd.f32 %v1107, %v1184
    %v1186 = vpop.f32.mrb[0].mxu0
    %v1187 = vadd.f32 %v1108, %v1186
    %v1188 = vpop.f32.mrb[0].mxu0
    %v1189 = vpop.f32.mrb[0].mxu0
    %1190 = vdwg.mxu0
    %v1191 = vxor.u32 %v1144, 2147483648
    %v1192 = vmul.f32 %v1191, 1.442695
    %v1193 = vpow.pop %v1192
    %v1194 = vadd.f32 %v1193, 1.0
    %v1195 = vrcp.pop %v1194
    %v1196 = vmul.f32 1.0, %v1195
    %v1197 = vxor.u32 %v1146, 2147483648
    %v1198 = vmul.f32 %v1197, 1.442695
    %v1199 = vpow.pop %v1198
    %v1200 = vadd.f32 %v1199, 1.0
    %v1201 = vrcp.pop %v1200
    %v1202 = vmul.f32 1.0, %v1201
    %v1203 = vtanh.pop %v1185
    %v1204 = vxor.u32 %v1187, 2147483648
    %v1205 = vmul.f32 %v1204, 1.442695
    %v1206 = vpow.pop %v1205
    %v1207 = vadd.f32 %v1206, 1.0
    %v1208 = vrcp.pop %v1207
    %v1209 = vmul.f32 1.0, %v1208
    %v1210 = vmul.f32 %v1202, %v1098
    %v1211 = vmul.f32 %v1196, %v1203
    %v1212 = vadd.f32 %v1210, %v1211
    %v1213 = vtanh.pop %v1212
    %v1214 = vmul.f32 %v1209, %v1213
    %v1215 = vpack.c.bf16 %v1214, %v1214
    %s1216 = smul.u32 6, 4
    %s1217 = smul.addr %s1216, 8
    %s1218 = scalar_lea.vmem [#allocation2], %s1217
    %v1219 = vld [vmem:[%s1218] sm:$0xff]
    %v1220 = vld [vmem:[%s1218 + $0x8] sm:$0xff]
    %v1221 = vld [vmem:[%s1218 + $0x10] sm:$0xff]
    %v1222 = vld [vmem:[%s1218 + $0x18] sm:$0xff]
    %1223 = vmatprep.subr.bf16.mxu0 %v476
    %1224 = vmatpush1.bf16.msra.mxu0 %v475
    %1225 = vmatprep.subr.bf16.mxu0 %v480
    %1226 = vmatpush1.bf16.msra.mxu0 %v479
    %1227 = vmatprep.subr.bf16.mxu0 %v484
    %1228 = vmatpush1.bf16.msra.mxu0 %v483
    %1229 = vmatprep.subr.bf16.mxu0 %v488
    %1230 = vmatpush1.bf16.msra.mxu0 %v487
    %1231 = vmatprep.subr.bf16.mxu0 %v492
    %1232 = vmatpush1.bf16.msra.mxu0 %v491
    %1233 = vmatprep.subr.bf16.mxu0 %v496
    %1234 = vmatpush1.bf16.msra.mxu0 %v495
    %1235 = vmatprep.subr.bf16.mxu0 %v500
    %1236 = vmatpush1.bf16.msra.mxu0 %v499
    %1237 = vmatprep.subr.bf16.mxu0 %v504
    %1238 = vmatpush1.bf16.msra.mxu0 %v503
    %1239 = vmatprep.subr.bf16.mxu0 0
    %1240 = vmatpush1.bf16.msra.mxu0 0
    %1241 = vmatprep.subr.bf16.mxu0 0
    %1242 = vmatpush1.bf16.msra.mxu0 0
    %1243 = vmatprep.subr.bf16.mxu0 0
    %1244 = vmatpush1.bf16.msra.mxu0 0
    %1245 = vmatprep.subr.bf16.mxu0 0
    %1246 = vmatpush1.bf16.msra.mxu0 0
    %1247 = vmatprep.subr.bf16.mxu0 0
    %1248 = vmatpush1.bf16.msra.mxu0 0
    %1249 = vmatprep.subr.bf16.mxu0 0
    %1250 = vmatpush1.bf16.msra.mxu0 0
    %1251 = vmatprep.subr.bf16.mxu0 0
    %1252 = vmatpush1.bf16.msra.mxu0 0
    %1253 = vmatprep.subr.bf16.mxu0 0
    %1254 = vmatpush1.bf16.msra.mxu0 0
    %1255 = vmatprep.mubr.bf16.mxu0 0
    %1256 = vmatmul.mubr.bf16.gmra.mrb[0].mxu0 %v1215
    %v1257 = vpop.f32.mrb[0].mxu0
    %v1258 = vadd.f32 %v1219, %v1257
    %v1259 = vpop.f32.mrb[0].mxu0
    %v1260 = vadd.f32 %v1220, %v1259
    %v1261 = vpop.f32.mrb[0].mxu0
    %v1262 = vpop.f32.mrb[0].mxu0
    %1263 = vdwg.mxu0
    %1264 = vmatprep.subr.bf16.mxu0 %v478
    %1265 = vmatpush1.bf16.msra.mxu0 %v477
    %1266 = vmatprep.subr.bf16.mxu0 %v482
    %1267 = vmatpush1.bf16.msra.mxu0 %v481
    %1268 = vmatprep.subr.bf16.mxu0 %v486
    %1269 = vmatpush1.bf16.msra.mxu0 %v485
    %1270 = vmatprep.subr.bf16.mxu0 %v490
    %1271 = vmatpush1.bf16.msra.mxu0 %v489
    %1272 = vmatprep.subr.bf16.mxu0 %v494
    %1273 = vmatpush1.bf16.msra.mxu0 %v493
    %1274 = vmatprep.subr.bf16.mxu0 %v498
    %1275 = vmatpush1.bf16.msra.mxu0 %v497
    %1276 = vmatprep.subr.bf16.mxu0 %v502
    %1277 = vmatpush1.bf16.msra.mxu0 %v501
    %1278 = vmatprep.subr.bf16.mxu0 %v506
    %1279 = vmatpush1.bf16.msra.mxu0 %v505
    %1280 = vmatprep.subr.bf16.mxu0 0
    %1281 = vmatpush1.bf16.msra.mxu0 0
    %1282 = vmatprep.subr.bf16.mxu0 0
    %1283 = vmatpush1.bf16.msra.mxu0 0
    %1284 = vmatprep.subr.bf16.mxu0 0
    %1285 = vmatpush1.bf16.msra.mxu0 0
    %1286 = vmatprep.subr.bf16.mxu0 0
    %1287 = vmatpush1.bf16.msra.mxu0 0
    %1288 = vmatprep.subr.bf16.mxu0 0
    %1289 = vmatpush1.bf16.msra.mxu0 0
    %1290 = vmatprep.subr.bf16.mxu0 0
    %1291 = vmatpush1.bf16.msra.mxu0 0
    %1292 = vmatprep.subr.bf16.mxu0 0
    %1293 = vmatpush1.bf16.msra.mxu0 0
    %1294 = vmatprep.subr.bf16.mxu0 0
    %1295 = vmatpush1.bf16.msra.mxu0 0
    %1296 = vmatprep.mubr.bf16.mxu0 0
    %1297 = vmatmul.mubr.bf16.gmra.mrb[0].mxu0 %v1215
    %v1298 = vpop.f32.mrb[0].mxu0
    %v1299 = vadd.f32 %v1221, %v1298
    %v1300 = vpop.f32.mrb[0].mxu0
    %v1301 = vadd.f32 %v1222, %v1300
    %v1302 = vpop.f32.mrb[0].mxu0
    %v1303 = vpop.f32.mrb[0].mxu0
    %1304 = vdwg.mxu0
    %v1305 = vxor.u32 %v1258, 2147483648
    %v1306 = vmul.f32 %v1305, 1.442695
    %v1307 = vpow.pop %v1306
    %v1308 = vadd.f32 %v1307, 1.0
    %v1309 = vrcp.pop %v1308
    %v1310 = vmul.f32 1.0, %v1309
    %v1311 = vxor.u32 %v1260, 2147483648
    %v1312 = vmul.f32 %v1311, 1.442695
    %v1313 = vpow.pop %v1312
    %v1314 = vadd.f32 %v1313, 1.0
    %v1315 = vrcp.pop %v1314
    %v1316 = vmul.f32 1.0, %v1315
    %v1317 = vtanh.pop %v1299
    %v1318 = vxor.u32 %v1301, 2147483648
    %v1319 = vmul.f32 %v1318, 1.442695
    %v1320 = vpow.pop %v1319
    %v1321 = vadd.f32 %v1320, 1.0
    %v1322 = vrcp.pop %v1321
    %v1323 = vmul.f32 1.0, %v1322
    %v1324 = vmul.f32 %v1316, %v1212
    %v1325 = vmul.f32 %v1310, %v1317
    %v1326 = vadd.f32 %v1324, %v1325
    %v1327 = vtanh.pop %v1326
    %v1328 = vmul.f32 %v1323, %v1327
    %v1329 = vpack.c.bf16 %v1328, %v1328
    %s1330 = smul.u32 7, 4
    %s1331 = smul.addr %s1330, 8
    %s1332 = scalar_lea.vmem [#allocation2], %s1331
    %v1333 = vld [vmem:[%s1332] sm:$0xff]
    %v1334 = vld [vmem:[%s1332 + $0x8] sm:$0xff]
    %v1335 = vld [vmem:[%s1332 + $0x10] sm:$0xff]
    %v1336 = vld [vmem:[%s1332 + $0x18] sm:$0xff]
    %1337 = vmatprep.subr.bf16.mxu0 %v476
    %1338 = vmatpush1.bf16.msra.mxu0 %v475
    %1339 = vmatprep.subr.bf16.mxu0 %v480
    %1340 = vmatpush1.bf16.msra.mxu0 %v479
    %1341 = vmatprep.subr.bf16.mxu0 %v484
    %1342 = vmatpush1.bf16.msra.mxu0 %v483
    %1343 = vmatprep.subr.bf16.mxu0 %v488
    %1344 = vmatpush1.bf16.msra.mxu0 %v487
    %1345 = vmatprep.subr.bf16.mxu0 %v492
    %1346 = vmatpush1.bf16.msra.mxu0 %v491
    %1347 = vmatprep.subr.bf16.mxu0 %v496
    %1348 = vmatpush1.bf16.msra.mxu0 %v495
    %1349 = vmatprep.subr.bf16.mxu0 %v500
    %1350 = vmatpush1.bf16.msra.mxu0 %v499
    %1351 = vmatprep.subr.bf16.mxu0 %v504
    %1352 = vmatpush1.bf16.msra.mxu0 %v503
    %1353 = vmatprep.subr.bf16.mxu0 0
    %1354 = vmatpush1.bf16.msra.mxu0 0
    %1355 = vmatprep.subr.bf16.mxu0 0
    %1356 = vmatpush1.bf16.msra.mxu0 0
    %1357 = vmatprep.subr.bf16.mxu0 0
    %1358 = vmatpush1.bf16.msra.mxu0 0
    %1359 = vmatprep.subr.bf16.mxu0 0
    %1360 = vmatpush1.bf16.msra.mxu0 0
    %1361 = vmatprep.subr.bf16.mxu0 0
    %1362 = vmatpush1.bf16.msra.mxu0 0
    %1363 = vmatprep.subr.bf16.mxu0 0
    %1364 = vmatpush1.bf16.msra.mxu0 0
    %1365 = vmatprep.subr.bf16.mxu0 0
    %1366 = vmatpush1.bf16.msra.mxu0 0
    %1367 = vmatprep.subr.bf16.mxu0 0
    %1368 = vmatpush1.bf16.msra.mxu0 0
    %1369 = vmatprep.mubr.bf16.mxu0 0
    %1370 = vmatmul.mubr.bf16.gmra.mrb[0].mxu0 %v1329
    %v1371 = vpop.f32.mrb[0].mxu0
    %v1372 = vadd.f32 %v1333, %v1371
    %v1373 = vpop.f32.mrb[0].mxu0
    %v1374 = vadd.f32 %v1334, %v1373
    %v1375 = vpop.f32.mrb[0].mxu0
    %v1376 = vpop.f32.mrb[0].mxu0
    %1377 = vdwg.mxu0
    %1378 = vmatprep.subr.bf16.mxu0 %v478
    %1379 = vmatpush1.bf16.msra.mxu0 %v477
    %1380 = vmatprep.subr.bf16.mxu0 %v482
    %1381 = vmatpush1.bf16.msra.mxu0 %v481
    %1382 = vmatprep.subr.bf16.mxu0 %v486
    %1383 = vmatpush1.bf16.msra.mxu0 %v485
    %1384 = vmatprep.subr.bf16.mxu0 %v490
    %1385 = vmatpush1.bf16.msra.mxu0 %v489
    %1386 = vmatprep.subr.bf16.mxu0 %v494
    %1387 = vmatpush1.bf16.msra.mxu0 %v493
    %1388 = vmatprep.subr.bf16.mxu0 %v498
    %1389 = vmatpush1.bf16.msra.mxu0 %v497
    %1390 = vmatprep.subr.bf16.mxu0 %v502
    %1391 = vmatpush1.bf16.msra.mxu0 %v501
    %1392 = vmatprep.subr.bf16.mxu0 %v506
    %1393 = vmatpush1.bf16.msra.mxu0 %v505
    %1394 = vmatprep.subr.bf16.mxu0 0
    %1395 = vmatpush1.bf16.msra.mxu0 0
    %1396 = vmatprep.subr.bf16.mxu0 0
    %1397 = vmatpush1.bf16.msra.mxu0 0
    %1398 = vmatprep.subr.bf16.mxu0 0
    %1399 = vmatpush1.bf16.msra.mxu0 0
    %1400 = vmatprep.subr.bf16.mxu0 0
    %1401 = vmatpush1.bf16.msra.mxu0 0
    %1402 = vmatprep.subr.bf16.mxu0 0
    %1403 = vmatpush1.bf16.msra.mxu0 0
    %1404 = vmatprep.subr.bf16.mxu0 0
    %1405 = vmatpush1.bf16.msra.mxu0 0
    %1406 = vmatprep.subr.bf16.mxu0 0
    %1407 = vmatpush1.bf16.msra.mxu0 0
    %1408 = vmatprep.subr.bf16.mxu0 0
    %1409 = vmatpush1.bf16.msra.mxu0 0
    %1410 = vmatprep.mubr.bf16.mxu0 0
    %1411 = vmatmul.mubr.bf16.gmra.mrb[0].mxu0 %v1329
    %v1412 = vpop.f32.mrb[0].mxu0
    %v1413 = vadd.f32 %v1335, %v1412
    %v1414 = vpop.f32.mrb[0].mxu0
    %v1415 = vadd.f32 %v1336, %v1414
    %v1416 = vpop.f32.mrb[0].mxu0
    %v1417 = vpop.f32.mrb[0].mxu0
    %1418 = vdwg.mxu0
    %v1419 = vxor.u32 %v1372, 2147483648
    %v1420 = vmul.f32 %v1419, 1.442695
    %v1421 = vpow.pop %v1420
    %v1422 = vadd.f32 %v1421, 1.0
    %v1423 = vrcp.pop %v1422
    %v1424 = vmul.f32 1.0, %v1423
    %v1425 = vxor.u32 %v1374, 2147483648
    %v1426 = vmul.f32 %v1425, 1.442695
    %v1427 = vpow.pop %v1426
    %v1428 = vadd.f32 %v1427, 1.0
    %v1429 = vrcp.pop %v1428
    %v1430 = vmul.f32 1.0, %v1429
    %v1431 = vtanh.pop %v1413
    %v1432 = vxor.u32 %v1415, 2147483648
    %v1433 = vmul.f32 %v1432, 1.442695
    %v1434 = vpow.pop %v1433
    %v1435 = vadd.f32 %v1434, 1.0
    %v1436 = vrcp.pop %v1435
    %v1437 = vmul.f32 1.0, %v1436
    %v1438 = vmul.f32 %v1430, %v1326
    %v1439 = vmul.f32 %v1424, %v1431
    %v1440 = vadd.f32 %v1438, %v1439
    %v1441 = vtanh.pop %v1440
    %v1442 = vmul.f32 %v1437, %v1441
    %1443 = vst [vmem:[#allocation11] sm:$0xff] %v1442
    %1444 = vst [vmem:[#allocation12] sm:$0xff] %v1440
    // Predicated region
    $region34: #{tpu_custom_call.1} parent=1 // pred_check
      _
    $region35: #{tpu_custom_call.1} parent=1 // pred_check_branch
      %1446 = sbr.rel (0) target = $region37
    $region36: #{tpu_custom_call.1} parent=1 // pred_region
      %s1448 = ssub.s32 128, 128
      %1449 = vsyncadd [#allocation5], %s1448
      %s1451 = sshll.u32 [#allocation11], 4
      %s1452 = int_to_ptr.vmem [resolvable:$true] %s1451
      %1454 = dma.vmem_to_hbm [thread:$0]  %s1452, 128, %s4, [#allocation5]
    $region37: #{tpu_custom_call.1} parent=1 // pred_fallthru
      _
    // Predicated region
    $region38: #{tpu_custom_call.1} parent=1 // pred_check
      _
    $region39: #{tpu_custom_call.1} parent=1 // pred_check_branch
      %1456 = sbr.rel (0) target = $region41
    $region40: #{tpu_custom_call.1} parent=1 // pred_region
      %s1458 = ssub.s32 128, 128
      %1459 = vsyncadd [#allocation13], %s1458
      %s1461 = sshll.u32 [#allocation12], 4
      %s1462 = int_to_ptr.vmem [resolvable:$true] %s1461
      %1464 = dma.vmem_to_hbm [thread:$0]  %s1462, 128, %s5, [#allocation13]
    $region41: #{tpu_custom_call.1} parent=1 // pred_fallthru
      _
    // Predicated region
    $region42: #{tpu_custom_call.1} parent=1 // pred_check
      _
    $region43: #{tpu_custom_call.1} parent=1 // pred_check_branch
      %1466 = sbr.rel (0) target = $region45
    $region44: #{tpu_custom_call.1} parent=1 // pred_region
      %1467 = dma.done [#allocation5], 128
    $region45: #{tpu_custom_call.1} parent=1 // pred_fallthru
      _
    // Predicated region
    $region46: #{tpu_custom_call.1} parent=1 // pred_check
      _
    $region47: #{tpu_custom_call.1} parent=1 // pred_check_branch
      %1469 = sbr.rel (0) target = $region49
    $region48: #{tpu_custom_call.1} parent=1 // pred_region
      %1470 = dma.done [#allocation13], 128
    $region49: #{tpu_custom_call.1} parent=1 // pred_fallthru
      _
    %1471 = vsyncpa [#allocation4], 1
    %1472 = vsyncpa [#allocation7], 1
    %1473 = vsyncpa [#allocation10], 1
    %1474 = vsyncpa [#allocation5], 1
    %1475 = vsyncpa [#allocation13], 1

</llo_original>
